<compile_context>
chip_gen: v7x
topology: tpu7x:2x2x1
jax: 0.10.0
libtpu: 0.0.40
codegen_flags: <defaults>
</compile_context>

<pallas_src>
import functools

import jax
import jax.numpy as jnp
from jax import lax
from jax.experimental import pallas as pl
from jax.experimental.pallas import tpu as pltpu


def _round_up(x: int, m: int) -> int:
    return ((x + m - 1) // m) * m


def _vmem_budget_bytes() -> int:
    """Generation-aware VMEM budget (headroom below physical VMEM)."""
    phys = 64 * 1024 * 1024  # conservative default = v7x per-TC physical VMEM
    try:
        phys = int(pltpu.get_tpu_info().vmem_capacity_bytes)
    except Exception:
        pass
    return max(32 * 1024 * 1024, int(phys * 0.72))


def _pick_tiles(b_pad, s_pad, e2, dec_hid, a_pad, enc_bytes, budget):
    """Largest (TB, TS) whose estimated VMEM footprint fits the budget."""
    tb_cands = sorted(
        {t for t in (256, 192, 128, 96, 64, 48, 32, 24, 16, 8)
         if t <= b_pad and b_pad % t == 0}
        | ({b_pad} if b_pad <= 512 else set()),
        reverse=True)
    ts_cands = sorted(
        {t for t in (1024, 768, 512, 384, 256, 128)
         if t <= s_pad and s_pad % t == 0}
        | ({s_pad} if s_pad <= 1024 else set()),
        reverse=True)

    def est(tb, ts):
        enc = 3 * ts * tb * e2 * enc_bytes        # 2 pipeline bufs + reshape slack
        dec = 2 * tb * dec_hid * enc_bytes
        outb = 4 * tb * s_pad * 4                 # resident f32 out + softmax temps
        wts = 2 * (dec_hid + e2 + 8) * a_pad * 4  # VMEM-resident weights/bias
        dp = tb * a_pad * 4                       # hoisted dec projection scratch
        interm = 3 * ts * tb * a_pad * 4          # enc_proj / energy f32 temporaries
        return enc + dec + outb + wts + dp + interm

    best = None
    for tb in tb_cands:
        for ts in ts_cands:
            if est(tb, ts) > int(budget * 0.85):
                continue
            # Prefer: biggest DMA per step, then >=2 batch tiles (v7x megacore),
            # then bigger batch tile (denser transpose / bigger dec matmul).
            key = (ts * tb, 1 if b_pad >= 2 * tb else 0, tb)
            if best is None or key > best[0]:
                best = (key, tb, ts)
    if best is None:
        return 8, 128
    return best[1], best[2]


def attention_kernel(dec_ref, enc_ref, w_dec_ref, w_enc_ref, b_ref, out_ref,
                     dp_ref, *, src_len):
    # dec_ref   : [TB, H_dec]
    # enc_ref   : [TS, TB, E2]   (tile of encoder outputs, native [S,B,E2] layout)
    # w_dec_ref : [H_dec, A_pad] (VMEM-resident, constant index_map)
    # w_enc_ref : [E2,    A_pad]
    # b_ref     : [1,     A_pad]
    # out_ref   : [TB, S_pad]    (resident across the src grid axis)
    # dp_ref    : [TB, A_pad]    f32 scratch — decoder projection (+bias)
    si = pl.program_id(1)
    n_s = pl.num_programs(1)
    TS, TB, E2 = enc_ref.shape

    # Decoder projection with the bias folded in — hoisted out of the src
    # loop: computed once per batch tile, reused for every src tile.
    @pl.when(si == 0)
    def _():
        dp_ref[...] = (jnp.dot(dec_ref[...], w_dec_ref[...],
                               preferred_element_type=jnp.float32)
                       + b_ref[...])

    # Encoder projection: flatten (TS, TB) onto the MXU sublane axis
    # (layout no-op because TB is a multiple of 8).
    enc_flat = enc_ref[...].reshape(TS * TB, E2)
    enc_proj = jnp.dot(enc_flat, w_enc_ref[...],
                       preferred_element_type=jnp.float32)
    enc_proj = enc_proj.reshape(TS, TB, -1)

    # energy = tanh(Linear(cat(dec, enc))); zero-padded A columns stay 0.
    energy = jnp.tanh(enc_proj + dp_ref[...][None, :, :])     # [TS, TB, A] f32
    att = jnp.sum(energy, axis=-1)                            # [TS, TB]
    att = jnp.transpose(att, (1, 0))                          # [TB, TS]

    # Mask invalid src columns AT WRITE TIME (-inf) so out_ref never holds
    # uninitialized VMEM when the final softmax reads it back.
    col0 = pl.multiple_of(si * TS, TS)
    col = col0 + lax.broadcasted_iota(jnp.int32, att.shape, 1)
    att = jnp.where(col < src_len, att, -jnp.inf)
    out_ref[:, pl.ds(col0, TS)] = att.astype(out_ref.dtype)

    # Last src tile: softmax over the full, resident row block.
    @pl.when(si == n_s - 1)
    def _():
        scores = out_ref[...]                                  # [TB, S_pad] f32
        m = jnp.max(scores, axis=-1, keepdims=True)
        e = jnp.exp(scores - m)                                # padded cols -> 0
        denom = jnp.sum(e, axis=-1, keepdims=True)
        out_ref[...] = e * pl.reciprocal(denom, approx=False)


def prepare_attention_params(w, b, dec_hid_dim, param_dtype=jnp.float32):
    """One-time weight prep (keep OUT of the per-call path).
    PyTorch cat order is (decoder_hidden, encoder_outputs) -> split W columns;
    bias folded into the decoder projection; attn_dim zero-padded to 128."""
    attn_dim, attn_in = w.shape
    e2 = attn_in - dec_hid_dim
    a_pad = _round_up(attn_dim, 128)
    w_t = w.T
    w_dec = jnp.zeros((dec_hid_dim, a_pad), param_dtype)
    w_dec = w_dec.at[:, :attn_dim].set(w_t[:dec_hid_dim, :].astype(param_dtype))
    w_enc = jnp.zeros((e2, a_pad), param_dtype)
    w_enc = w_enc.at[:, :attn_dim].set(w_t[dec_hid_dim:, :].astype(param_dtype))
    b2d = jnp.zeros((1, a_pad), jnp.float32)
    b2d = b2d.at[0, :attn_dim].set(b.astype(jnp.float32))
    return w_dec, w_enc, b2d


def attention_forward(decoder_hidden, encoder_outputs, w_dec, w_enc, b2d):
    """decoder_hidden: [B, dec_hid]; encoder_outputs: [src_len, B, 2*enc_hid]
    (native PyTorch layout — NOT permuted). Weights from
    prepare_attention_params. Returns softmax attention of shape [B, src_len].
    Feed dec/enc (and prepared weights) as bf16 to halve HBM traffic."""
    B, dec_hid = decoder_hidden.shape
    src_len, _, e2 = encoder_outputs.shape
    a_pad = w_enc.shape[1]
    enc_bytes = jnp.dtype(encoder_outputs.dtype).itemsize

    # Pad batch to a multiple of 8 (sublane group): removes the fragile TB=B
    # fallback and keeps the in-kernel reshape a layout no-op.  No-op copy
    # when B is already a multiple of 8.
    B_pad = _round_up(B, 8)
    if B_pad != B:
        decoder_hidden = jnp.pad(decoder_hidden, ((0, B_pad - B), (0, 0)))
        encoder_outputs = jnp.pad(encoder_outputs,
                                  ((0, 0), (0, B_pad - B), (0, 0)))

    S_pad = _round_up(src_len, 128)            # lane-dense output last dim
    budget = _vmem_budget_bytes()
    TB, TS = _pick_tiles(B_pad, S_pad, e2, dec_hid, a_pad, enc_bytes, budget)
    n_b = B_pad // TB
    n_s = S_pad // TS

    kernel = functools.partial(attention_kernel, src_len=src_len)

    out = pl.pallas_call(
        kernel,
        out_shape=jax.ShapeDtypeStruct((B_pad, S_pad), jnp.float32),
        grid=(n_b, n_s),
        in_specs=[
            pl.BlockSpec((TB, dec_hid), lambda bi, si: (bi, 0)),
            pl.BlockSpec((TS, TB, e2), lambda bi, si: (si, bi, 0)),
            pl.BlockSpec((dec_hid, a_pad), lambda bi, si: (0, 0)),
            pl.BlockSpec((e2, a_pad), lambda bi, si: (0, 0)),
            pl.BlockSpec((1, a_pad), lambda bi, si: (0, 0)),
        ],
        out_specs=pl.BlockSpec((TB, S_pad), lambda bi, si: (bi, 0)),
        scratch_shapes=[pltpu.VMEM((TB, a_pad), jnp.float32)],
        compiler_params=pltpu.CompilerParams(
            dimension_semantics=("parallel", "arbitrary"),
            vmem_limit_bytes=budget,
        ),
    )(decoder_hidden, encoder_outputs, w_dec, w_enc, b2d)

    return out[:B, :src_len]


def reference_forward(decoder_hidden, encoder_outputs, w, b):
    """Pure-JAX reference mirroring the PyTorch forward exactly."""
    src_len = encoder_outputs.shape[0]
    rep_dec = jnp.repeat(decoder_hidden[:, None, :], src_len, axis=1)
    enc = jnp.transpose(encoder_outputs, (1, 0, 2))
    cat = jnp.concatenate([rep_dec, enc], axis=2)
    energy = jnp.tanh(jnp.einsum("bsi,oi->bso", cat, w) + b)
    att = jnp.sum(energy, axis=2)
    return jax.nn.softmax(att, axis=1)


if __name__ == "__main__":
    # Small deterministic shapes consistent with the module.
    enc_hid_dim = 16
    dec_hid_dim = 32
    attn_dim = 32
    batch = 2
    src_len = 8
    attn_in = enc_hid_dim * 2 + dec_hid_dim

    key = jax.random.PRNGKey(0)
    k1, k2, k3, k4 = jax.random.split(key, 4)

    decoder_hidden = jax.random.normal(k1, (batch, dec_hid_dim), dtype=jnp.float32)
    encoder_outputs = jax.random.normal(
        k2, (src_len, batch, 2 * enc_hid_dim), dtype=jnp.float32)

    # Deterministic nn.Linear-style init: U(-1/sqrt(attn_in), 1/sqrt(attn_in))
    bound = 1.0 / (attn_in ** 0.5)
    w = jax.random.uniform(k3, (attn_dim, attn_in),
                           minval=-bound, maxval=bound, dtype=jnp.float32)
    b = jax.random.uniform(k4, (attn_dim,),
                           minval=-bound, maxval=bound, dtype=jnp.float32)

    # --- f32 path: strict correctness check ---------------------------------
    w_dec, w_enc, b2d = prepare_attention_params(w, b, dec_hid_dim)  # once
    out = attention_forward(decoder_hidden, encoder_outputs, w_dec, w_enc, b2d)
    out = jax.block_until_ready(out)

    ref = reference_forward(decoder_hidden, encoder_outputs, w, b)
    assert out.shape == (batch, src_len)
    assert jnp.allclose(out, ref, atol=1e-5, rtol=1e-5), "mismatch vs reference"
    assert jnp.allclose(jnp.sum(out, axis=1), 1.0, atol=1e-5), "rows must sum to 1"

    # --- bf16-streamed path: halves HBM traffic on the bandwidth-bound enc --
    w_dec_h, w_enc_h, b2d_h = prepare_attention_params(
        w, b, dec_hid_dim, param_dtype=jnp.bfloat16)
    dec_h = decoder_hidden.astype(jnp.bfloat16)
    enc_h = encoder_outputs.astype(jnp.bfloat16)
    out_h = jax.block_until_ready(
        attention_forward(dec_h, enc_h, w_dec_h, w_enc_h, b2d_h))
    # Reference on the same bf16-quantized operands (math in f32): residual
    # difference is only MXU-vs-XLA f32 accumulation order.
    ref_h = reference_forward(dec_h.astype(jnp.float32), enc_h.astype(jnp.float32),
                              w.astype(jnp.bfloat16).astype(jnp.float32), b)
    assert out_h.shape == (batch, src_len)
    assert jnp.allclose(out_h, ref_h, atol=5e-4, rtol=5e-4), "bf16 path mismatch"
    assert jnp.allclose(jnp.sum(out_h, axis=1), 1.0, atol=1e-3)

    print("KERNEL_OK")
</pallas_src>

<mosaic_0001>
module attributes {stable_mosaic.version = 11 : i64} {
  func.func @attention_kernel(%arg0: i32, %arg1: i32, %arg2: memref<8x32xf32, #tpu.memory_space<vmem>>, %arg3: memref<128x8x32xf32, #tpu.memory_space<vmem>>, %arg4: memref<32x128xf32, #tpu.memory_space<vmem>>, %arg5: memref<32x128xf32, #tpu.memory_space<vmem>>, %arg6: memref<1x128xf32, #tpu.memory_space<vmem>>, %arg7: memref<8x128xf32, #tpu.memory_space<vmem>>, %arg8: memref<8x128xf32, #tpu.memory_space<vmem>>) attributes {dimension_semantics = [#tpu.dimension_semantics<parallel>, #tpu.dimension_semantics<arbitrary>], iteration_bounds = array<i64: 1, 1>, scalar_prefetch = 0 : i64, scratch_operands = 1 : i64, tpu.core_type = #tpu.core_type<tc>, window_params = [{transform_indices = @transform_0, window_bounds = array<i64: 8, 32>}, {transform_indices = @transform_1, window_bounds = array<i64: 128, 8, 32>}, {pipeline_mode = #tpu.pipeline_mode<synchronous>, transform_indices = @transform_2, window_bounds = array<i64: 32, 128>}, {pipeline_mode = #tpu.pipeline_mode<synchronous>, transform_indices = @transform_3, window_bounds = array<i64: 32, 128>}, {pipeline_mode = #tpu.pipeline_mode<synchronous>, transform_indices = @transform_4, window_bounds = array<i64: 1, 128>}, {transform_indices = @transform_5, window_bounds = array<i64: 8, 128>}]} {
    %c0_i32 = arith.constant 0 : i32
    %0 = arith.cmpi eq, %arg1, %c0_i32 : i32
    %1 = arith.extui %0 : i1 to i32
    %c0_i32_0 = arith.constant 0 : i32
    %2 = arith.cmpi ne, %1, %c0_i32_0 : i32
    scf.if %2 {
      %c0_12 = arith.constant 0 : index
      %c0_13 = arith.constant 0 : index
      %29 = vector.load %arg2[%c0_12, %c0_13] : memref<8x32xf32, #tpu.memory_space<vmem>>, vector<8x32xf32>
      %c0_14 = arith.constant 0 : index
      %c0_15 = arith.constant 0 : index
      %30 = vector.load %arg4[%c0_14, %c0_15] : memref<32x128xf32, #tpu.memory_space<vmem>>, vector<32x128xf32>
      %cst_16 = arith.constant dense<0.000000e+00> : vector<8x128xf32>
      %31 = tpu.matmul %29, %30, %cst_16 {dimension_numbers = #tpu.dot_dimension_numbers<[1], [0], [0], [1], [0, 0, 1, 1], [], []>} : vector<8x32xf32>, vector<32x128xf32>, vector<8x128xf32> -> vector<8x128xf32>
      %c0_17 = arith.constant 0 : index
      %c0_18 = arith.constant 0 : index
      %32 = vector.load %arg6[%c0_17, %c0_18] : memref<1x128xf32, #tpu.memory_space<vmem>>, vector<1x128xf32>
      %33 = vector.broadcast %32 : vector<1x128xf32> to vector<8x128xf32>
      %34 = arith.addf %31, %33 : vector<8x128xf32>
      %c0_19 = arith.constant 0 : index
      %c0_20 = arith.constant 0 : index
      %35 = vector.load %arg8[%c0_19, %c0_20] : memref<8x128xf32, #tpu.memory_space<vmem>>, vector<8x128xf32>
      tpu.vector_store %arg8[%c0_19, %c0_20], %34 {strides = array<i32>} : memref<8x128xf32, #tpu.memory_space<vmem>>, vector<8x128xf32>,
    } else {
    }
    %c0 = arith.constant 0 : index
    %c0_1 = arith.constant 0 : index
    %c0_2 = arith.constant 0 : index
    %3 = vector.load %arg3[%c0, %c0_1, %c0_2] : memref<128x8x32xf32, #tpu.memory_space<vmem>>, vector<128x8x32xf32>
    %4 = vector.shape_cast %3 : vector<128x8x32xf32> to vector<1024x32xf32>
    %c0_3 = arith.constant 0 : index
    %c0_4 = arith.constant 0 : index
    %5 = vector.load %arg5[%c0_3, %c0_4] : memref<32x128xf32, #tpu.memory_space<vmem>>, vector<32x128xf32>
    %cst = arith.constant dense<0.000000e+00> : vector<1024x128xf32>
    %6 = tpu.matmul %4, %5, %cst {dimension_numbers = #tpu.dot_dimension_numbers<[1], [0], [0], [1], [0, 0, 1, 1], [], []>} : vector<1024x32xf32>, vector<32x128xf32>, vector<1024x128xf32> -> vector<1024x128xf32>
    %7 = vector.shape_cast %6 : vector<1024x128xf32> to vector<128x8x128xf32>
    %c0_5 = arith.constant 0 : index
    %c0_6 = arith.constant 0 : index
    %8 = vector.load %arg8[%c0_5, %c0_6] : memref<8x128xf32, #tpu.memory_space<vmem>>, vector<8x128xf32>
    %9 = vector.shape_cast %8 : vector<8x128xf32> to vector<1x8x128xf32>
    %10 = vector.broadcast %9 : vector<1x8x128xf32> to vector<128x8x128xf32>
    %11 = arith.addf %7, %10 : vector<128x8x128xf32>
    %12 = math.tanh %11 : vector<128x8x128xf32>
    %cst_7 = arith.constant dense<0.000000e+00> : vector<128x8xf32>
    %13 = vector.multi_reduction <add>, %12, %cst_7 [2] : vector<128x8x128xf32> to vector<128x8xf32>
    %14 = tpu.transpose %13, [1, 0] : vector<128x8xf32> -> vector<8x128xf32>
    %c128_i32 = arith.constant 128 : i32
    %15 = arith.muli %arg1, %c128_i32 : i32
    %16 = tpu.assume_multiple %15, 128 : i32
    %17 = tpu.iota {dimensions = array<i32: 1>} : vector<8x128xi32>
    %18 = vector.broadcast %16 : i32 to vector<8x128xi32>
    %19 = arith.addi %18, %17 : vector<8x128xi32>
    %c8_i32 = arith.constant 8 : i32
    %20 = vector.broadcast %c8_i32 : i32 to vector<8x128xi32>
    %21 = arith.cmpi slt, %19, %20 : vector<8x128xi32>
    %cst_8 = arith.constant 0xFF800000 : f32
    %22 = vector.broadcast %cst_8 : f32 to vector<8x128xf32>
    %23 = arith.select %21, %14, %22 : vector<8x128xi1>, vector<8x128xf32>
    %c0_9 = arith.constant 0 : index
    %24 = arith.index_cast %16 : i32 to index
    %25 = vector.load %arg7[%c0_9, %24] : memref<8x128xf32, #tpu.memory_space<vmem>>, vector<8x128xf32>
    tpu.vector_store %arg7[%c0_9, %24], %23 {strides = array<i32>} : memref<8x128xf32, #tpu.memory_space<vmem>>, vector<8x128xf32>,
    %c0_i32_10 = arith.constant 0 : i32
    %26 = arith.cmpi eq, %arg1, %c0_i32_10 : i32
    %27 = arith.extui %26 : i1 to i32
    %c0_i32_11 = arith.constant 0 : i32
    %28 = arith.cmpi ne, %27, %c0_i32_11 : i32
    scf.if %28 {
      %c0_12 = arith.constant 0 : index
      %c0_13 = arith.constant 0 : index
      %29 = vector.load %arg7[%c0_12, %c0_13] : memref<8x128xf32, #tpu.memory_space<vmem>>, vector<8x128xf32>
      %cst_14 = arith.constant dense<0xFF800000> : vector<8xf32>
      %30 = vector.multi_reduction <maximumf>, %29, %cst_14 [1] : vector<8x128xf32> to vector<8xf32>
      %31 = vector.shape_cast %30 : vector<8xf32> to vector<8x1xf32>
      %32 = vector.broadcast %31 : vector<8x1xf32> to vector<8x128xf32>
      %33 = arith.subf %29, %32 : vector<8x128xf32>
      %34 = math.exp %33 : vector<8x128xf32>
      %cst_15 = arith.constant dense<0.000000e+00> : vector<8xf32>
      %35 = vector.multi_reduction <add>, %34, %cst_15 [1] : vector<8x128xf32> to vector<8xf32>
      %36 = vector.shape_cast %35 : vector<8xf32> to vector<8x1xf32>
      %37 = tpu.reciprocal %36 : vector<8x1xf32> -> vector<8x1xf32>
      %38 = vector.broadcast %37 : vector<8x1xf32> to vector<8x128xf32>
      %39 = arith.mulf %34, %38 : vector<8x128xf32>
      %c0_16 = arith.constant 0 : index
      %c0_17 = arith.constant 0 : index
      %40 = vector.load %arg7[%c0_16, %c0_17] : memref<8x128xf32, #tpu.memory_space<vmem>>, vector<8x128xf32>
      tpu.vector_store %arg7[%c0_16, %c0_17], %39 {strides = array<i32>} : memref<8x128xf32, #tpu.memory_space<vmem>>, vector<8x128xf32>,
    } else {
    }
    return
  }
  func.func @transform_0(%arg0: i32, %arg1: i32) -> (i32, i32) {
    %c0_i32 = arith.constant 0 : i32
    %c0_i32_0 = arith.constant 0 : i32
    return %arg0, %c0_i32 : i32, i32
  }
  func.func @transform_1(%arg0: i32, %arg1: i32) -> (i32, i32, i32) {
    %c0_i32 = arith.constant 0 : i32
    %c0_i32_0 = arith.constant 0 : i32
    return %arg1, %arg0, %c0_i32 : i32, i32, i32
  }
  func.func @transform_2(%arg0: i32, %arg1: i32) -> (i32, i32) {
    %c0_i32 = arith.constant 0 : i32
    %c0_i32_0 = arith.constant 0 : i32
    %c0_i32_1 = arith.constant 0 : i32
    return %c0_i32, %c0_i32_0 : i32, i32
  }
  func.func @transform_3(%arg0: i32, %arg1: i32) -> (i32, i32) {
    %c0_i32 = arith.constant 0 : i32
    %c0_i32_0 = arith.constant 0 : i32
    %c0_i32_1 = arith.constant 0 : i32
    return %c0_i32, %c0_i32_0 : i32, i32
  }
  func.func @transform_4(%arg0: i32, %arg1: i32) -> (i32, i32) {
    %c0_i32 = arith.constant 0 : i32
    %c0_i32_0 = arith.constant 0 : i32
    %c0_i32_1 = arith.constant 0 : i32
    return %c0_i32, %c0_i32_0 : i32, i32
  }
  func.func @transform_5(%arg0: i32, %arg1: i32) -> (i32, i32) {
    %c0_i32 = arith.constant 0 : i32
    %c0_i32_0 = arith.constant 0 : i32
    return %arg0, %c0_i32 : i32, i32
  }
}

</mosaic_0001>

<llo_original>
// kernel: tpu_custom_call.1
$region0: #{tpu_custom_call.1}
  #allocation0 [shape = 'u32[]', space=smem, size = 0x4, offset = 0x4, fixed_abs, tag = 'smem constant byte address 0x4 - core index']
  #allocation1 [shape = 'u32[144,128]{1,0:T(1,128)}', space=vmem, size = 0x12000, scoped, tag = 'internal scratch']
  #allocation2 [shape = 'f32[8,128]{1,0:T(8,128)}', space=vmem, size = 0x1000, scoped, tag = 'scratch operand']
  %s0 = inlined_call_operand.hbm [shape: f32[8,32], index: 0, kind: input, shape index: {}]
  %s1 = inlined_call_operand.hbm [shape: f32[8,8,32], index: 1, kind: input, shape index: {}]
  %s2 = inlined_call_operand.hbm [shape: f32[32,128], index: 2, kind: input, shape index: {}]
  %s3 = inlined_call_operand.hbm [shape: f32[32,128], index: 3, kind: input, shape index: {}]
  %s4 = inlined_call_operand.vmem [shape: f32[1,128], index: 4, kind: input, shape index: {}]
  %s5 = inlined_call_operand.hbm [shape: f32[8,128], index: 5, kind: output, shape index: {}]
  %s6 = sld [smem:[#allocation0]]
  $region54: #{tpu_custom_call.1} parent=0
    _
  %s8 = ssub.s32 1, %s6
  %s9 = scalar_select 0, %s8, %s6
  $region1: #{tpu_custom_call.1} parent=0
    #allocation3 [shape = 'u8[4096]{0}', space=vmem, size = 0x1000, scoped, tag = 'input window, operand 0, single buffered']
    #allocation4 [shape = 's32[1]{0}', space=sflag, size = 0x4, scoped, tag = 'scoped memory for tpu_custom_call.1']
    #allocation5 [shape = 's32[1]{0}', space=sflag, size = 0x4, scoped, tag = 'scoped memory for tpu_custom_call.1']
    #allocation6 [shape = 'u8[524288]{0}', space=vmem, size = 0x80000, scoped, tag = 'input window, operand 1, single buffered']
    #allocation7 [shape = 's32[1]{0}', space=sflag, size = 0x4, scoped, tag = 'scoped memory for tpu_custom_call.1']
    #allocation8 [shape = 'u8[16384]{0}', space=vmem, size = 0x4000, scoped, tag = 'input window, operand 2, single buffered']
    #allocation9 [shape = 'u8[16384]{0}', space=vmem, size = 0x4000, scoped, tag = 'input window, operand 3, single buffered']
    #allocation10 [shape = 's32[1]{0}', space=sflag, size = 0x4, scoped, tag = 'scoped memory for tpu_custom_call.1']
    #allocation11 [shape = 'u8[4096]{0}', space=vmem, size = 0x1000, scoped, tag = 'output window, operand 0, single buffered']
    %10 = vsyncpa [#allocation4], 0
    %11 = vsyncpa [#allocation7], 0
    %12 = vsyncpa [#allocation10], 0
    %13 = vsyncpa [#allocation5], 0
    // Predicated region
    $region2: #{tpu_custom_call.1} parent=1 // pred_check
      _
    $region3: #{tpu_custom_call.1} parent=1 // pred_check_branch
      %15 = sbr.rel (0) target = $region5
    $region4: #{tpu_custom_call.1} parent=1 // pred_region
      %s17 = ssub.s32 128, 128
      %18 = vsyncadd [#allocation4], %s17
      %s20 = sshll.u32 [#allocation3], 4
      %s21 = int_to_ptr.vmem [resolvable:$true] %s20
      %23 = dma.hbm_to_vmem [thread:$0]  %s0, 128, %s21, [#allocation4]
    $region5: #{tpu_custom_call.1} parent=1 // pred_fallthru
      _
    // Predicated region
    $region6: #{tpu_custom_call.1} parent=1 // pred_check
      _
    $region7: #{tpu_custom_call.1} parent=1 // pred_check_branch
      %25 = sbr.rel (0) target = $region9
    $region8: #{tpu_custom_call.1} parent=1 // pred_region
      %s27 = ssub.s32 16384, 1024
      %28 = vsyncadd [#allocation7], %s27
      %s29 = sshll.u32 [#allocation6], 4
      %s30 = int_to_ptr.vmem [resolvable:$true] %s29
      %35 = dma.hbm_to_vmem [thread:$0]  %s1, 1024, %s30, [#allocation7], 128, 128, 8
    $region9: #{tpu_custom_call.1} parent=1 // pred_fallthru
      _
    // Predicated region
    $region10: #{tpu_custom_call.1} parent=1 // pred_check
      _
    $region11: #{tpu_custom_call.1} parent=1 // pred_check_branch
      %37 = sbr.rel (0) target = $region13
    $region12: #{tpu_custom_call.1} parent=1 // pred_region
      %s39 = ssub.s32 512, 512
      %40 = vsyncadd [#allocation7], %s39
      %s41 = sshll.u32 [#allocation8], 4
      %s42 = int_to_ptr.vmem [resolvable:$true] %s41
      %47 = dma.hbm_to_vmem [thread:$0]  %s2, 512, %s42, [#allocation7], 128, 128, 8
    $region13: #{tpu_custom_call.1} parent=1 // pred_fallthru
      _
    // Predicated region
    $region14: #{tpu_custom_call.1} parent=1 // pred_check
      _
    $region15: #{tpu_custom_call.1} parent=1 // pred_check_branch
      %49 = sbr.rel (0) target = $region17
    $region16: #{tpu_custom_call.1} parent=1 // pred_region
      %s51 = ssub.s32 512, 512
      %52 = vsyncadd [#allocation10], %s51
      %s53 = sshll.u32 [#allocation9], 4
      %s54 = int_to_ptr.vmem [resolvable:$true] %s53
      %59 = dma.hbm_to_vmem [thread:$0]  %s3, 512, %s54, [#allocation10], 128, 128, 8
    $region17: #{tpu_custom_call.1} parent=1 // pred_fallthru
      _
    // Predicated region
    $region18: #{tpu_custom_call.1} parent=1 // pred_check
      _
    $region19: #{tpu_custom_call.1} parent=1 // pred_check_branch
      %61 = sbr.rel (0) target = $region21
    $region20: #{tpu_custom_call.1} parent=1 // pred_region
      _
    $region21: #{tpu_custom_call.1} parent=1 // pred_fallthru
      _
    // Predicated region
    $region22: #{tpu_custom_call.1} parent=1 // pred_check
      _
    $region23: #{tpu_custom_call.1} parent=1 // pred_check_branch
      %63 = sbr.rel (0) target = $region25
    $region24: #{tpu_custom_call.1} parent=1 // pred_region
      %64 = dma.done [#allocation4], 128
    $region25: #{tpu_custom_call.1} parent=1 // pred_fallthru
      _
    // Predicated region
    $region26: #{tpu_custom_call.1} parent=1 // pred_check
      _
    $region27: #{tpu_custom_call.1} parent=1 // pred_check_branch
      %66 = sbr.rel (0) target = $region29
    $region28: #{tpu_custom_call.1} parent=1 // pred_region
      %67 = dma.done [#allocation7], 16384
    $region29: #{tpu_custom_call.1} parent=1 // pred_fallthru
      _
    // Predicated region
    $region30: #{tpu_custom_call.1} parent=1 // pred_check
      _
    $region31: #{tpu_custom_call.1} parent=1 // pred_check_branch
      %69 = sbr.rel (0) target = $region33
    $region32: #{tpu_custom_call.1} parent=1 // pred_region
      %70 = dma.done [#allocation7], 512
    $region33: #{tpu_custom_call.1} parent=1 // pred_fallthru
      _
    // Predicated region
    $region34: #{tpu_custom_call.1} parent=1 // pred_check
      _
    $region35: #{tpu_custom_call.1} parent=1 // pred_check_branch
      %72 = sbr.rel (0) target = $region37
    $region36: #{tpu_custom_call.1} parent=1 // pred_region
      %73 = dma.done [#allocation10], 512
    $region37: #{tpu_custom_call.1} parent=1 // pred_fallthru
      _
    %p74 = scmp.eq.s32.totalorder 0, 0
    // Predicated region
    $region38: #{tpu_custom_call.1} parent=1 // pred_check
      %p75 = pneg %p74
    $region39: #{tpu_custom_call.1} parent=1 // pred_check_branch
      %77 = sbr.rel (%p75) target = $region41
    $region40: #{tpu_custom_call.1} parent=1 // pred_region
      %v78 = vld [vmem:[#allocation3] sm:$0xff]
      %v79 = vld [vmem:[#allocation8] sm:$0xff]
      %v80 = vld [vmem:[#allocation8 + $0x8] sm:$0xff]
      %v81 = vld [vmem:[#allocation8 + $0x10] sm:$0xff]
      %v82 = vld [vmem:[#allocation8 + $0x18] sm:$0xff]
      %v83 = vld [vmem:[%s4] sm:$0x1]
      %v85 = vlaneseq
      %v86 = vshrl.u32 %v85, 7
      %v87 = vsub.s32 0, %v86
      %v88 = vrot.slane %v83, %v87
      %vm90 = vcmask 261120
      %v92 = vsel %vm90, %v78, 0
      %94 = vmatprep.subr.mxu0 0.0
      %95 = vmatpush1.msra.mxu0 %v79
      %96 = vmatprep.subr.mxu0 0.0
      %97 = vmatpush1.msra.mxu0 %v80
      %98 = vmatprep.subr.mxu0 0.0
      %99 = vmatpush1.msra.mxu0 %v81
      %100 = vmatprep.subr.mxu0 0.0
      %101 = vmatpush1.msra.mxu0 %v82
      %102 = vmatprep.subr.mxu0 0.0
      %103 = vmatpush1.msra.mxu0 0.0
      %104 = vmatprep.subr.mxu0 0.0
      %105 = vmatpush1.msra.mxu0 0.0
      %106 = vmatprep.subr.mxu0 0.0
      %107 = vmatpush1.msra.mxu0 0.0
      %108 = vmatprep.subr.mxu0 0.0
      %109 = vmatpush1.msra.mxu0 0.0
      %110 = vmatprep.subr.mxu0 0.0
      %111 = vmatpush1.msra.mxu0 0.0
      %112 = vmatprep.subr.mxu0 0.0
      %113 = vmatpush1.msra.mxu0 0.0
      %114 = vmatprep.subr.mxu0 0.0
      %115 = vmatpush1.msra.mxu0 0.0
      %116 = vmatprep.subr.mxu0 0.0
      %117 = vmatpush1.msra.mxu0 0.0
      %118 = vmatprep.subr.mxu0 0.0
      %119 = vmatpush1.msra.mxu0 0.0
      %120 = vmatprep.subr.mxu0 0.0
      %121 = vmatpush1.msra.mxu0 0.0
      %122 = vmatprep.subr.mxu0 0.0
      %123 = vmatpush1.msra.mxu0 0.0
      %124 = vmatprep.subr.mxu0 0.0
      %125 = vmatpush1.msra.mxu0 0.0
      %126 = vmatprep.subr.mxu0 0.0
      %127 = vmatpush1.msra.mxu0 0.0
      %128 = vmatprep.subr.mxu0 0.0
      %129 = vmatpush1.msra.mxu0 0.0
      %130 = vmatprep.subr.mxu0 0.0
      %131 = vmatpush1.msra.mxu0 0.0
      %132 = vmatprep.subr.mxu0 0.0
      %133 = vmatpush1.msra.mxu0 0.0
      %134 = vmatprep.subr.mxu0 0.0
      %135 = vmatpush1.msra.mxu0 0.0
      %136 = vmatprep.subr.mxu0 0.0
      %137 = vmatpush1.msra.mxu0 0.0
      %138 = vmatprep.subr.mxu0 0.0
      %139 = vmatpush1.msra.mxu0 0.0
      %140 = vmatprep.subr.mxu0 0.0
      %141 = vmatpush1.msra.mxu0 0.0
      %142 = vmatprep.subr.mxu0 0.0
      %143 = vmatpush1.msra.mxu0 0.0
      %144 = vmatprep.subr.mxu0 0.0
      %145 = vmatpush1.msra.mxu0 0.0
      %146 = vmatprep.subr.mxu0 0.0
      %147 = vmatpush1.msra.mxu0 0.0
      %148 = vmatprep.subr.mxu0 0.0
      %149 = vmatpush1.msra.mxu0 0.0
      %150 = vmatprep.subr.mxu0 0.0
      %151 = vmatpush1.msra.mxu0 0.0
      %152 = vmatprep.subr.mxu0 0.0
      %153 = vmatpush1.msra.mxu0 0.0
      %154 = vmatprep.subr.mxu0 0.0
      %155 = vmatpush1.msra.mxu0 0.0
      %156 = vmatprep.subr.mxu0 0.0
      %157 = vmatpush1.msra.mxu0 0.0
      %158 = vmatprep.mubr.f32.mxu0 0.0
      %159 = vmatmul.mubr.f32.gmra.mrb[0].mxu0 %v92
      %v160 = vpop.f32.mrb[0].mxu0
      %v161 = vadd.f32 %v88, %v160
      %v162 = vpop.f32.mrb[0].mxu0
      %163 = vdwg.mxu0
      %164 = vst [vmem:[#allocation2] sm:$0xff] %v161
    $region41: #{tpu_custom_call.1} parent=1 // pred_fallthru
      _
    %v165 = vld [vmem:[#allocation6] sm:$0xff]
    %v166 = vld [vmem:[#allocation6 + $0x8] sm:$0xff]
    %v167 = vld [vmem:[#allocation6 + $0x10] sm:$0xff]
    %v168 = vld [vmem:[#allocation6 + $0x18] sm:$0xff]
    %v169 = vld [vmem:[#allocation6 + $0x20] sm:$0xff]
    %v170 = vld [vmem:[#allocation6 + $0x28] sm:$0xff]
    %v171 = vld [vmem:[#allocation6 + $0x30] sm:$0xff]
    %v172 = vld [vmem:[#allocation6 + $0x38] sm:$0xff]
    %v173 = vld [vmem:[#allocation6 + $0x40] sm:$0xff]
    %v174 = vld [vmem:[#allocation6 + $0x48] sm:$0xff]
    %v175 = vld [vmem:[#allocation6 + $0x50] sm:$0xff]
    %v176 = vld [vmem:[#allocation6 + $0x58] sm:$0xff]
    %v177 = vld [vmem:[#allocation6 + $0x60] sm:$0xff]
    %v178 = vld [vmem:[#allocation6 + $0x68] sm:$0xff]
    %v179 = vld [vmem:[#allocation6 + $0x70] sm:$0xff]
    %v180 = vld [vmem:[#allocation6 + $0x78] sm:$0xff]
    %v181 = vld [vmem:[#allocation6 + $0x80] sm:$0xff]
    %v182 = vld [vmem:[#allocation6 + $0x88] sm:$0xff]
    %v183 = vld [vmem:[#allocation6 + $0x90] sm:$0xff]
    %v184 = vld [vmem:[#allocation6 + $0x98] sm:$0xff]
    %v185 = vld [vmem:[#allocation6 + $0xa0] sm:$0xff]
    %v186 = vld [vmem:[#allocation6 + $0xa8] sm:$0xff]
    %v187 = vld [vmem:[#allocation6 + $0xb0] sm:$0xff]
    %v188 = vld [vmem:[#allocation6 + $0xb8] sm:$0xff]
    %v189 = vld [vmem:[#allocation6 + $0xc0] sm:$0xff]
    %v190 = vld [vmem:[#allocation6 + $0xc8] sm:$0xff]
    %v191 = vld [vmem:[#allocation6 + $0xd0] sm:$0xff]
    %v192 = vld [vmem:[#allocation6 + $0xd8] sm:$0xff]
    %v193 = vld [vmem:[#allocation6 + $0xe0] sm:$0xff]
    %v194 = vld [vmem:[#allocation6 + $0xe8] sm:$0xff]
    %v195 = vld [vmem:[#allocation6 + $0xf0] sm:$0xff]
    %v196 = vld [vmem:[#allocation6 + $0xf8] sm:$0xff]
    %v197 = vld [vmem:[#allocation6 + $0x100] sm:$0xff]
    %v198 = vld [vmem:[#allocation6 + $0x108] sm:$0xff]
    %v199 = vld [vmem:[#allocation6 + $0x110] sm:$0xff]
    %v200 = vld [vmem:[#allocation6 + $0x118] sm:$0xff]
    %v201 = vld [vmem:[#allocation6 + $0x120] sm:$0xff]
    %v202 = vld [vmem:[#allocation6 + $0x128] sm:$0xff]
    %v203 = vld [vmem:[#allocation6 + $0x130] sm:$0xff]
    %v204 = vld [vmem:[#allocation6 + $0x138] sm:$0xff]
    %v205 = vld [vmem:[#allocation6 + $0x140] sm:$0xff]
    %v206 = vld [vmem:[#allocation6 + $0x148] sm:$0xff]
    %v207 = vld [vmem:[#allocation6 + $0x150] sm:$0xff]
    %v208 = vld [vmem:[#allocation6 + $0x158] sm:$0xff]
    %v209 = vld [vmem:[#allocation6 + $0x160] sm:$0xff]
    %v210 = vld [vmem:[#allocation6 + $0x168] sm:$0xff]
    %v211 = vld [vmem:[#allocation6 + $0x170] sm:$0xff]
    %v212 = vld [vmem:[#allocation6 + $0x178] sm:$0xff]
    %v213 = vld [vmem:[#allocation6 + $0x180] sm:$0xff]
    %v214 = vld [vmem:[#allocation6 + $0x188] sm:$0xff]
    %v215 = vld [vmem:[#allocation6 + $0x190] sm:$0xff]
    %v216 = vld [vmem:[#allocation6 + $0x198] sm:$0xff]
    %v217 = vld [vmem:[#allocation6 + $0x1a0] sm:$0xff]
    %v218 = vld [vmem:[#allocation6 + $0x1a8] sm:$0xff]
    %v219 = vld [vmem:[#allocation6 + $0x1b0] sm:$0xff]
    %v220 = vld [vmem:[#allocation6 + $0x1b8] sm:$0xff]
    %v221 = vld [vmem:[#allocation6 + $0x1c0] sm:$0xff]
    %v222 = vld [vmem:[#allocation6 + $0x1c8] sm:$0xff]
    %v223 = vld [vmem:[#allocation6 + $0x1d0] sm:$0xff]
    %v224 = vld [vmem:[#allocation6 + $0x1d8] sm:$0xff]
    %v225 = vld [vmem:[#allocation6 + $0x1e0] sm:$0xff]
    %v226 = vld [vmem:[#allocation6 + $0x1e8] sm:$0xff]
    %v227 = vld [vmem:[#allocation6 + $0x1f0] sm:$0xff]
    %v228 = vld [vmem:[#allocation6 + $0x1f8] sm:$0xff]
    %v229 = vld [vmem:[#allocation6 + $0x200] sm:$0xff]
    %v230 = vld [vmem:[#allocation6 + $0x208] sm:$0xff]
    %v231 = vld [vmem:[#allocation6 + $0x210] sm:$0xff]
    %v232 = vld [vmem:[#allocation6 + $0x218] sm:$0xff]
    %v233 = vld [vmem:[#allocation6 + $0x220] sm:$0xff]
    %v234 = vld [vmem:[#allocation6 + $0x228] sm:$0xff]
    %v235 = vld [vmem:[#allocation6 + $0x230] sm:$0xff]
    %v236 = vld [vmem:[#allocation6 + $0x238] sm:$0xff]
    %v237 = vld [vmem:[#allocation6 + $0x240] sm:$0xff]
    %v238 = vld [vmem:[#allocation6 + $0x248] sm:$0xff]
    %v239 = vld [vmem:[#allocation6 + $0x250] sm:$0xff]
    %v240 = vld [vmem:[#allocation6 + $0x258] sm:$0xff]
    %v241 = vld [vmem:[#allocation6 + $0x260] sm:$0xff]
    %v242 = vld [vmem:[#allocation6 + $0x268] sm:$0xff]
    %v243 = vld [vmem:[#allocation6 + $0x270] sm:$0xff]
    %v244 = vld [vmem:[#allocation6 + $0x278] sm:$0xff]
    %v245 = vld [vmem:[#allocation6 + $0x280] sm:$0xff]
    %v246 = vld [vmem:[#allocation6 + $0x288] sm:$0xff]
    %v247 = vld [vmem:[#allocation6 + $0x290] sm:$0xff]
    %v248 = vld [vmem:[#allocation6 + $0x298] sm:$0xff]
    %v249 = vld [vmem:[#allocation6 + $0x2a0] sm:$0xff]
    %v250 = vld [vmem:[#allocation6 + $0x2a8] sm:$0xff]
    %v251 = vld [vmem:[#allocation6 + $0x2b0] sm:$0xff]
    %v252 = vld [vmem:[#allocation6 + $0x2b8] sm:$0xff]
    %v253 = vld [vmem:[#allocation6 + $0x2c0] sm:$0xff]
    %v254 = vld [vmem:[#allocation6 + $0x2c8] sm:$0xff]
    %v255 = vld [vmem:[#allocation6 + $0x2d0] sm:$0xff]
    %v256 = vld [vmem:[#allocation6 + $0x2d8] sm:$0xff]
    %v257 = vld [vmem:[#allocation6 + $0x2e0] sm:$0xff]
    %v258 = vld [vmem:[#allocation6 + $0x2e8] sm:$0xff]
    %v259 = vld [vmem:[#allocation6 + $0x2f0] sm:$0xff]
    %v260 = vld [vmem:[#allocation6 + $0x2f8] sm:$0xff]
    %v261 = vld [vmem:[#allocation6 + $0x300] sm:$0xff]
    %v262 = vld [vmem:[#allocation6 + $0x308] sm:$0xff]
    %v263 = vld [vmem:[#allocation6 + $0x310] sm:$0xff]
    %v264 = vld [vmem:[#allocation6 + $0x318] sm:$0xff]
    %v265 = vld [vmem:[#allocation6 + $0x320] sm:$0xff]
    %v266 = vld [vmem:[#allocation6 + $0x328] sm:$0xff]
    %v267 = vld [vmem:[#allocation6 + $0x330] sm:$0xff]
    %v268 = vld [vmem:[#allocation6 + $0x338] sm:$0xff]
    %v269 = vld [vmem:[#allocation6 + $0x340] sm:$0xff]
    %v270 = vld [vmem:[#allocation6 + $0x348] sm:$0xff]
    %v271 = vld [vmem:[#allocation6 + $0x350] sm:$0xff]
    %v272 = vld [vmem:[#allocation6 + $0x358] sm:$0xff]
    %v273 = vld [vmem:[#allocation6 + $0x360] sm:$0xff]
    %v274 = vld [vmem:[#allocation6 + $0x368] sm:$0xff]
    %v275 = vld [vmem:[#allocation6 + $0x370] sm:$0xff]
    %v276 = vld [vmem:[#allocation6 + $0x378] sm:$0xff]
    %v277 = vld [vmem:[#allocation6 + $0x380] sm:$0xff]
    %v278 = vld [vmem:[#allocation6 + $0x388] sm:$0xff]
    %v279 = vld [vmem:[#allocation6 + $0x390] sm:$0xff]
    %v280 = vld [vmem:[#allocation6 + $0x398] sm:$0xff]
    %v281 = vld [vmem:[#allocation6 + $0x3a0] sm:$0xff]
    %v282 = vld [vmem:[#allocation6 + $0x3a8] sm:$0xff]
    %v283 = vld [vmem:[#allocation6 + $0x3b0] sm:$0xff]
    %v284 = vld [vmem:[#allocation6 + $0x3b8] sm:$0xff]
    %v285 = vld [vmem:[#allocation6 + $0x3c0] sm:$0xff]
    %v286 = vld [vmem:[#allocation6 + $0x3c8] sm:$0xff]
    %v287 = vld [vmem:[#allocation6 + $0x3d0] sm:$0xff]
    %v288 = vld [vmem:[#allocation6 + $0x3d8] sm:$0xff]
    %v289 = vld [vmem:[#allocation6 + $0x3e0] sm:$0xff]
    %v290 = vld [vmem:[#allocation6 + $0x3e8] sm:$0xff]
    %v291 = vld [vmem:[#allocation6 + $0x3f0] sm:$0xff]
    %v292 = vld [vmem:[#allocation6 + $0x3f8] sm:$0xff]
    %v293 = vld [vmem:[#allocation9] sm:$0xff]
    %v294 = vld [vmem:[#allocation9 + $0x8] sm:$0xff]
    %v295 = vld [vmem:[#allocation9 + $0x10] sm:$0xff]
    %v296 = vld [vmem:[#allocation9 + $0x18] sm:$0xff]
    %vm297 = vcmask 261120
    %v299 = vsel %vm297, %v165, 0
    %v302 = vsel %vm297, %v166, 0
    %v305 = vsel %vm297, %v167, 0
    %v308 = vsel %vm297, %v168, 0
    %v311 = vsel %vm297, %v169, 0
    %v314 = vsel %vm297, %v170, 0
    %v317 = vsel %vm297, %v171, 0
    %v320 = vsel %vm297, %v172, 0
    %v323 = vsel %vm297, %v173, 0
    %v326 = vsel %vm297, %v174, 0
    %v329 = vsel %vm297, %v175, 0
    %v332 = vsel %vm297, %v176, 0
    %v335 = vsel %vm297, %v177, 0
    %v338 = vsel %vm297, %v178, 0
    %v341 = vsel %vm297, %v179, 0
    %v344 = vsel %vm297, %v180, 0
    %v347 = vsel %vm297, %v181, 0
    %v350 = vsel %vm297, %v182, 0
    %v353 = vsel %vm297, %v183, 0
    %v356 = vsel %vm297, %v184, 0
    %v359 = vsel %vm297, %v185, 0
    %v362 = vsel %vm297, %v186, 0
    %v365 = vsel %vm297, %v187, 0
    %v368 = vsel %vm297, %v188, 0
    %v371 = vsel %vm297, %v189, 0
    %v374 = vsel %vm297, %v190, 0
    %v377 = vsel %vm297, %v191, 0
    %v380 = vsel %vm297, %v192, 0
    %v383 = vsel %vm297, %v193, 0
    %v386 = vsel %vm297, %v194, 0
    %v389 = vsel %vm297, %v195, 0
    %v392 = vsel %vm297, %v196, 0
    %v395 = vsel %vm297, %v197, 0
    %v398 = vsel %vm297, %v198, 0
    %v401 = vsel %vm297, %v199, 0
    %v404 = vsel %vm297, %v200, 0
    %v407 = vsel %vm297, %v201, 0
    %v410 = vsel %vm297, %v202, 0
    %v413 = vsel %vm297, %v203, 0
    %v416 = vsel %vm297, %v204, 0
    %v419 = vsel %vm297, %v205, 0
    %v422 = vsel %vm297, %v206, 0
    %v425 = vsel %vm297, %v207, 0
    %v428 = vsel %vm297, %v208, 0
    %v431 = vsel %vm297, %v209, 0
    %v434 = vsel %vm297, %v210, 0
    %v437 = vsel %vm297, %v211, 0
    %v440 = vsel %vm297, %v212, 0
    %v443 = vsel %vm297, %v213, 0
    %v446 = vsel %vm297, %v214, 0
    %v449 = vsel %vm297, %v215, 0
    %v452 = vsel %vm297, %v216, 0
    %v455 = vsel %vm297, %v217, 0
    %v458 = vsel %vm297, %v218, 0
    %v461 = vsel %vm297, %v219, 0
    %v464 = vsel %vm297, %v220, 0
    %v467 = vsel %vm297, %v221, 0
    %v470 = vsel %vm297, %v222, 0
    %v473 = vsel %vm297, %v223, 0
    %v476 = vsel %vm297, %v224, 0
    %v479 = vsel %vm297, %v225, 0
    %v482 = vsel %vm297, %v226, 0
    %v485 = vsel %vm297, %v227, 0
    %v488 = vsel %vm297, %v228, 0
    %v491 = vsel %vm297, %v229, 0
    %v494 = vsel %vm297, %v230, 0
    %v497 = vsel %vm297, %v231, 0
    %v500 = vsel %vm297, %v232, 0
    %v503 = vsel %vm297, %v233, 0
    %v506 = vsel %vm297, %v234, 0
    %v509 = vsel %vm297, %v235, 0
    %v512 = vsel %vm297, %v236, 0
    %v515 = vsel %vm297, %v237, 0
    %v518 = vsel %vm297, %v238, 0
    %v521 = vsel %vm297, %v239, 0
    %v524 = vsel %vm297, %v240, 0
    %v527 = vsel %vm297, %v241, 0
    %v530 = vsel %vm297, %v242, 0
    %v533 = vsel %vm297, %v243, 0
    %v536 = vsel %vm297, %v244, 0
    %v539 = vsel %vm297, %v245, 0
    %v542 = vsel %vm297, %v246, 0
    %v545 = vsel %vm297, %v247, 0
    %v548 = vsel %vm297, %v248, 0
    %v551 = vsel %vm297, %v249, 0
    %v554 = vsel %vm297, %v250, 0
    %v557 = vsel %vm297, %v251, 0
    %v560 = vsel %vm297, %v252, 0
    %v563 = vsel %vm297, %v253, 0
    %v566 = vsel %vm297, %v254, 0
    %v569 = vsel %vm297, %v255, 0
    %v572 = vsel %vm297, %v256, 0
    %v575 = vsel %vm297, %v257, 0
    %v578 = vsel %vm297, %v258, 0
    %v581 = vsel %vm297, %v259, 0
    %v584 = vsel %vm297, %v260, 0
    %v587 = vsel %vm297, %v261, 0
    %v590 = vsel %vm297, %v262, 0
    %v593 = vsel %vm297, %v263, 0
    %v596 = vsel %vm297, %v264, 0
    %v599 = vsel %vm297, %v265, 0
    %v602 = vsel %vm297, %v266, 0
    %v605 = vsel %vm297, %v267, 0
    %v608 = vsel %vm297, %v268, 0
    %v611 = vsel %vm297, %v269, 0
    %v614 = vsel %vm297, %v270, 0
    %v617 = vsel %vm297, %v271, 0
    %v620 = vsel %vm297, %v272, 0
    %v623 = vsel %vm297, %v273, 0
    %v626 = vsel %vm297, %v274, 0
    %v629 = vsel %vm297, %v275, 0
    %v632 = vsel %vm297, %v276, 0
    %v635 = vsel %vm297, %v277, 0
    %v638 = vsel %vm297, %v278, 0
    %v641 = vsel %vm297, %v279, 0
    %v644 = vsel %vm297, %v280, 0
    %v647 = vsel %vm297, %v281, 0
    %v650 = vsel %vm297, %v282, 0
    %v653 = vsel %vm297, %v283, 0
    %v656 = vsel %vm297, %v284, 0
    %v659 = vsel %vm297, %v285, 0
    %v662 = vsel %vm297, %v286, 0
    %v665 = vsel %vm297, %v287, 0
    %v668 = vsel %vm297, %v288, 0
    %v671 = vsel %vm297, %v289, 0
    %v674 = vsel %vm297, %v290, 0
    %v677 = vsel %vm297, %v291, 0
    %v680 = vsel %vm297, %v292, 0
    %682 = vmatprep.subr.mxu0 0.0
    %683 = vmatpush1.msra.mxu0 %v293
    %684 = vmatprep.subr.mxu0 0.0
    %685 = vmatpush1.msra.mxu0 %v294
    %686 = vmatprep.subr.mxu0 0.0
    %687 = vmatpush1.msra.mxu0 %v295
    %688 = vmatprep.subr.mxu0 0.0
    %689 = vmatpush1.msra.mxu0 %v296
    %690 = vmatprep.subr.mxu0 0.0
    %691 = vmatpush1.msra.mxu0 0.0
    %692 = vmatprep.subr.mxu0 0.0
    %693 = vmatpush1.msra.mxu0 0.0
    %694 = vmatprep.subr.mxu0 0.0
    %695 = vmatpush1.msra.mxu0 0.0
    %696 = vmatprep.subr.mxu0 0.0
    %697 = vmatpush1.msra.mxu0 0.0
    %698 = vmatprep.subr.mxu0 0.0
    %699 = vmatpush1.msra.mxu0 0.0
    %700 = vmatprep.subr.mxu0 0.0
    %701 = vmatpush1.msra.mxu0 0.0
    %702 = vmatprep.subr.mxu0 0.0
    %703 = vmatpush1.msra.mxu0 0.0
    %704 = vmatprep.subr.mxu0 0.0
    %705 = vmatpush1.msra.mxu0 0.0
    %706 = vmatprep.subr.mxu0 0.0
    %707 = vmatpush1.msra.mxu0 0.0
    %708 = vmatprep.subr.mxu0 0.0
    %709 = vmatpush1.msra.mxu0 0.0
    %710 = vmatprep.subr.mxu0 0.0
    %711 = vmatpush1.msra.mxu0 0.0
    %712 = vmatprep.subr.mxu0 0.0
    %713 = vmatpush1.msra.mxu0 0.0
    %714 = vmatprep.subr.mxu0 0.0
    %715 = vmatpush1.msra.mxu0 0.0
    %716 = vmatprep.subr.mxu0 0.0
    %717 = vmatpush1.msra.mxu0 0.0
    %718 = vmatprep.subr.mxu0 0.0
    %719 = vmatpush1.msra.mxu0 0.0
    %720 = vmatprep.subr.mxu0 0.0
    %721 = vmatpush1.msra.mxu0 0.0
    %722 = vmatprep.subr.mxu0 0.0
    %723 = vmatpush1.msra.mxu0 0.0
    %724 = vmatprep.subr.mxu0 0.0
    %725 = vmatpush1.msra.mxu0 0.0
    %726 = vmatprep.subr.mxu0 0.0
    %727 = vmatpush1.msra.mxu0 0.0
    %728 = vmatprep.subr.mxu0 0.0
    %729 = vmatpush1.msra.mxu0 0.0
    %730 = vmatprep.subr.mxu0 0.0
    %731 = vmatpush1.msra.mxu0 0.0
    %732 = vmatprep.subr.mxu0 0.0
    %733 = vmatpush1.msra.mxu0 0.0
    %734 = vmatprep.subr.mxu0 0.0
    %735 = vmatpush1.msra.mxu0 0.0
    %736 = vmatprep.subr.mxu0 0.0
    %737 = vmatpush1.msra.mxu0 0.0
    %738 = vmatprep.subr.mxu0 0.0
    %739 = vmatpush1.msra.mxu0 0.0
    %740 = vmatprep.subr.mxu0 0.0
    %741 = vmatpush1.msra.mxu0 0.0
    %742 = vmatprep.subr.mxu0 0.0
    %743 = vmatpush1.msra.mxu0 0.0
    %744 = vmatprep.subr.mxu0 0.0
    %745 = vmatpush1.msra.mxu0 0.0
    %746 = vmatprep.mubr.f32.mxu0 0.0
    %747 = vmatmul.mubr.f32.gmra.mrb[0].mxu0 %v299
    %v748 = vpop.f32.mrb[0].mxu0
    %v749 = vadd.f32 0.0, %v748
    %v750 = vpop.f32.mrb[0].mxu0
    %751 = vmatprep.mubr.f32.mxu0 0.0
    %752 = vmatmul.mubr.f32.gmra.mrb[0].mxu0 %v302
    %v753 = vpop.f32.mrb[0].mxu0
    %v754 = vadd.f32 0.0, %v753
    %v755 = vpop.f32.mrb[0].mxu0
    %756 = vmatprep.mubr.f32.mxu0 0.0
    %757 = vmatmul.mubr.f32.gmra.mrb[0].mxu0 %v305
    %v758 = vpop.f32.mrb[0].mxu0
    %v759 = vadd.f32 0.0, %v758
    %v760 = vpop.f32.mrb[0].mxu0
    %761 = vmatprep.mubr.f32.mxu0 0.0
    %762 = vmatmul.mubr.f32.gmra.mrb[0].mxu0 %v308
    %v763 = vpop.f32.mrb[0].mxu0
    %v764 = vadd.f32 0.0, %v763
    %v765 = vpop.f32.mrb[0].mxu0
    %766 = vmatprep.mubr.f32.mxu0 0.0
    %767 = vmatmul.mubr.f32.gmra.mrb[0].mxu0 %v311
    %v768 = vpop.f32.mrb[0].mxu0
    %v769 = vadd.f32 0.0, %v768
    %v770 = vpop.f32.mrb[0].mxu0
    %771 = vmatprep.mubr.f32.mxu0 0.0
    %772 = vmatmul.mubr.f32.gmra.mrb[0].mxu0 %v314
    %v773 = vpop.f32.mrb[0].mxu0
    %v774 = vadd.f32 0.0, %v773
    %v775 = vpop.f32.mrb[0].mxu0
    %776 = vmatprep.mubr.f32.mxu0 0.0
    %777 = vmatmul.mubr.f32.gmra.mrb[0].mxu0 %v317
    %v778 = vpop.f32.mrb[0].mxu0
    %v779 = vadd.f32 0.0, %v778
    %v780 = vpop.f32.mrb[0].mxu0
    %781 = vmatprep.mubr.f32.mxu0 0.0
    %782 = vmatmul.mubr.f32.gmra.mrb[0].mxu0 %v320
    %v783 = vpop.f32.mrb[0].mxu0
    %v784 = vadd.f32 0.0, %v783
    %v785 = vpop.f32.mrb[0].mxu0
    %786 = vmatprep.mubr.f32.mxu0 0.0
    %787 = vmatmul.mubr.f32.gmra.mrb[0].mxu0 %v323
    %v788 = vpop.f32.mrb[0].mxu0
    %v789 = vadd.f32 0.0, %v788
    %v790 = vpop.f32.mrb[0].mxu0
    %791 = vmatprep.mubr.f32.mxu0 0.0
    %792 = vmatmul.mubr.f32.gmra.mrb[0].mxu0 %v326
    %v793 = vpop.f32.mrb[0].mxu0
    %v794 = vadd.f32 0.0, %v793
    %v795 = vpop.f32.mrb[0].mxu0
    %796 = vmatprep.mubr.f32.mxu0 0.0
    %797 = vmatmul.mubr.f32.gmra.mrb[0].mxu0 %v329
    %v798 = vpop.f32.mrb[0].mxu0
    %v799 = vadd.f32 0.0, %v798
    %v800 = vpop.f32.mrb[0].mxu0
    %801 = vmatprep.mubr.f32.mxu0 0.0
    %802 = vmatmul.mubr.f32.gmra.mrb[0].mxu0 %v332
    %v803 = vpop.f32.mrb[0].mxu0
    %v804 = vadd.f32 0.0, %v803
    %v805 = vpop.f32.mrb[0].mxu0
    %806 = vmatprep.mubr.f32.mxu0 0.0
    %807 = vmatmul.mubr.f32.gmra.mrb[0].mxu0 %v335
    %v808 = vpop.f32.mrb[0].mxu0
    %v809 = vadd.f32 0.0, %v808
    %v810 = vpop.f32.mrb[0].mxu0
    %811 = vmatprep.mubr.f32.mxu0 0.0
    %812 = vmatmul.mubr.f32.gmra.mrb[0].mxu0 %v338
    %v813 = vpop.f32.mrb[0].mxu0
    %v814 = vadd.f32 0.0, %v813
    %v815 = vpop.f32.mrb[0].mxu0
    %816 = vmatprep.mubr.f32.mxu0 0.0
    %817 = vmatmul.mubr.f32.gmra.mrb[0].mxu0 %v341
    %v818 = vpop.f32.mrb[0].mxu0
    %v819 = vadd.f32 0.0, %v818
    %v820 = vpop.f32.mrb[0].mxu0
    %821 = vmatprep.mubr.f32.mxu0 0.0
    %822 = vmatmul.mubr.f32.gmra.mrb[0].mxu0 %v344
    %v823 = vpop.f32.mrb[0].mxu0
    %v824 = vadd.f32 0.0, %v823
    %v825 = vpop.f32.mrb[0].mxu0
    %826 = vmatprep.mubr.f32.mxu0 0.0
    %827 = vmatmul.mubr.f32.gmra.mrb[0].mxu0 %v347
    %v828 = vpop.f32.mrb[0].mxu0
    %v829 = vadd.f32 0.0, %v828
    %v830 = vpop.f32.mrb[0].mxu0
    %831 = vmatprep.mubr.f32.mxu0 0.0
    %832 = vmatmul.mubr.f32.gmra.mrb[0].mxu0 %v350
    %v833 = vpop.f32.mrb[0].mxu0
    %v834 = vadd.f32 0.0, %v833
    %v835 = vpop.f32.mrb[0].mxu0
    %836 = vmatprep.mubr.f32.mxu0 0.0
    %837 = vmatmul.mubr.f32.gmra.mrb[0].mxu0 %v353
    %v838 = vpop.f32.mrb[0].mxu0
    %v839 = vadd.f32 0.0, %v838
    %v840 = vpop.f32.mrb[0].mxu0
    %841 = vmatprep.mubr.f32.mxu0 0.0
    %842 = vmatmul.mubr.f32.gmra.mrb[0].mxu0 %v356
    %v843 = vpop.f32.mrb[0].mxu0
    %v844 = vadd.f32 0.0, %v843
    %v845 = vpop.f32.mrb[0].mxu0
    %846 = vmatprep.mubr.f32.mxu0 0.0
    %847 = vmatmul.mubr.f32.gmra.mrb[0].mxu0 %v359
    %v848 = vpop.f32.mrb[0].mxu0
    %v849 = vadd.f32 0.0, %v848
    %v850 = vpop.f32.mrb[0].mxu0
    %851 = vmatprep.mubr.f32.mxu0 0.0
    %852 = vmatmul.mubr.f32.gmra.mrb[0].mxu0 %v362
    %v853 = vpop.f32.mrb[0].mxu0
    %v854 = vadd.f32 0.0, %v853
    %v855 = vpop.f32.mrb[0].mxu0
    %856 = vmatprep.mubr.f32.mxu0 0.0
    %857 = vmatmul.mubr.f32.gmra.mrb[0].mxu0 %v365
    %v858 = vpop.f32.mrb[0].mxu0
    %v859 = vadd.f32 0.0, %v858
    %v860 = vpop.f32.mrb[0].mxu0
    %861 = vmatprep.mubr.f32.mxu0 0.0
    %862 = vmatmul.mubr.f32.gmra.mrb[0].mxu0 %v368
    %v863 = vpop.f32.mrb[0].mxu0
    %v864 = vadd.f32 0.0, %v863
    %v865 = vpop.f32.mrb[0].mxu0
    %866 = vmatprep.mubr.f32.mxu0 0.0
    %867 = vmatmul.mubr.f32.gmra.mrb[0].mxu0 %v371
    %v868 = vpop.f32.mrb[0].mxu0
    %v869 = vadd.f32 0.0, %v868
    %v870 = vpop.f32.mrb[0].mxu0
    %871 = vmatprep.mubr.f32.mxu0 0.0
    %872 = vmatmul.mubr.f32.gmra.mrb[0].mxu0 %v374
    %v873 = vpop.f32.mrb[0].mxu0
    %v874 = vadd.f32 0.0, %v873
    %v875 = vpop.f32.mrb[0].mxu0
    %876 = vmatprep.mubr.f32.mxu0 0.0
    %877 = vmatmul.mubr.f32.gmra.mrb[0].mxu0 %v377
    %v878 = vpop.f32.mrb[0].mxu0
    %v879 = vadd.f32 0.0, %v878
    %v880 = vpop.f32.mrb[0].mxu0
    %881 = vmatprep.mubr.f32.mxu0 0.0
    %882 = vmatmul.mubr.f32.gmra.mrb[0].mxu0 %v380
    %v883 = vpop.f32.mrb[0].mxu0
    %v884 = vadd.f32 0.0, %v883
    %v885 = vpop.f32.mrb[0].mxu0
    %886 = vmatprep.mubr.f32.mxu0 0.0
    %887 = vmatmul.mubr.f32.gmra.mrb[0].mxu0 %v383
    %v888 = vpop.f32.mrb[0].mxu0
    %v889 = vadd.f32 0.0, %v888
    %v890 = vpop.f32.mrb[0].mxu0
    %891 = vmatprep.mubr.f32.mxu0 0.0
    %892 = vmatmul.mubr.f32.gmra.mrb[0].mxu0 %v386
    %v893 = vpop.f32.mrb[0].mxu0
    %v894 = vadd.f32 0.0, %v893
    %v895 = vpop.f32.mrb[0].mxu0
    %896 = vmatprep.mubr.f32.mxu0 0.0
    %897 = vmatmul.mubr.f32.gmra.mrb[0].mxu0 %v389
    %v898 = vpop.f32.mrb[0].mxu0
    %v899 = vadd.f32 0.0, %v898
    %v900 = vpop.f32.mrb[0].mxu0
    %901 = vmatprep.mubr.f32.mxu0 0.0
    %902 = vmatmul.mubr.f32.gmra.mrb[0].mxu0 %v392
    %v903 = vpop.f32.mrb[0].mxu0
    %v904 = vadd.f32 0.0, %v903
    %v905 = vpop.f32.mrb[0].mxu0
    %906 = vmatprep.mubr.f32.mxu0 0.0
    %907 = vmatmul.mubr.f32.gmra.mrb[0].mxu0 %v395
    %v908 = vpop.f32.mrb[0].mxu0
    %v909 = vadd.f32 0.0, %v908
    %v910 = vpop.f32.mrb[0].mxu0
    %911 = vmatprep.mubr.f32.mxu0 0.0
    %912 = vmatmul.mubr.f32.gmra.mrb[0].mxu0 %v398
    %v913 = vpop.f32.mrb[0].mxu0
    %v914 = vadd.f32 0.0, %v913
    %v915 = vpop.f32.mrb[0].mxu0
    %916 = vmatprep.mubr.f32.mxu0 0.0
    %917 = vmatmul.mubr.f32.gmra.mrb[0].mxu0 %v401
    %v918 = vpop.f32.mrb[0].mxu0
    %v919 = vadd.f32 0.0, %v918
    %v920 = vpop.f32.mrb[0].mxu0
    %921 = vmatprep.mubr.f32.mxu0 0.0
    %922 = vmatmul.mubr.f32.gmra.mrb[0].mxu0 %v404
    %v923 = vpop.f32.mrb[0].mxu0
    %v924 = vadd.f32 0.0, %v923
    %v925 = vpop.f32.mrb[0].mxu0
    %926 = vmatprep.mubr.f32.mxu0 0.0
    %927 = vmatmul.mubr.f32.gmra.mrb[0].mxu0 %v407
    %v928 = vpop.f32.mrb[0].mxu0
    %v929 = vadd.f32 0.0, %v928
    %v930 = vpop.f32.mrb[0].mxu0
    %931 = vmatprep.mubr.f32.mxu0 0.0
    %932 = vmatmul.mubr.f32.gmra.mrb[0].mxu0 %v410
    %v933 = vpop.f32.mrb[0].mxu0
    %v934 = vadd.f32 0.0, %v933
    %v935 = vpop.f32.mrb[0].mxu0
    %936 = vmatprep.mubr.f32.mxu0 0.0
    %937 = vmatmul.mubr.f32.gmra.mrb[0].mxu0 %v413
    %v938 = vpop.f32.mrb[0].mxu0
    %v939 = vadd.f32 0.0, %v938
    %v940 = vpop.f32.mrb[0].mxu0
    %941 = vmatprep.mubr.f32.mxu0 0.0
    %942 = vmatmul.mubr.f32.gmra.mrb[0].mxu0 %v416
    %v943 = vpop.f32.mrb[0].mxu0
    %v944 = vadd.f32 0.0, %v943
    %v945 = vpop.f32.mrb[0].mxu0
    %946 = vmatprep.mubr.f32.mxu0 0.0
    %947 = vmatmul.mubr.f32.gmra.mrb[0].mxu0 %v419
    %v948 = vpop.f32.mrb[0].mxu0
    %v949 = vadd.f32 0.0, %v948
    %v950 = vpop.f32.mrb[0].mxu0
    %951 = vmatprep.mubr.f32.mxu0 0.0
    %952 = vmatmul.mubr.f32.gmra.mrb[0].mxu0 %v422
    %v953 = vpop.f32.mrb[0].mxu0
    %v954 = vadd.f32 0.0, %v953
    %v955 = vpop.f32.mrb[0].mxu0
    %956 = vmatprep.mubr.f32.mxu0 0.0
    %957 = vmatmul.mubr.f32.gmra.mrb[0].mxu0 %v425
    %v958 = vpop.f32.mrb[0].mxu0
    %v959 = vadd.f32 0.0, %v958
    %v960 = vpop.f32.mrb[0].mxu0
    %961 = vmatprep.mubr.f32.mxu0 0.0
    %962 = vmatmul.mubr.f32.gmra.mrb[0].mxu0 %v428
    %v963 = vpop.f32.mrb[0].mxu0
    %v964 = vadd.f32 0.0, %v963
    %v965 = vpop.f32.mrb[0].mxu0
    %966 = vmatprep.mubr.f32.mxu0 0.0
    %967 = vmatmul.mubr.f32.gmra.mrb[0].mxu0 %v431
    %v968 = vpop.f32.mrb[0].mxu0
    %v969 = vadd.f32 0.0, %v968
    %v970 = vpop.f32.mrb[0].mxu0
    %971 = vmatprep.mubr.f32.mxu0 0.0
    %972 = vmatmul.mubr.f32.gmra.mrb[0].mxu0 %v434
    %v973 = vpop.f32.mrb[0].mxu0
    %v974 = vadd.f32 0.0, %v973
    %v975 = vpop.f32.mrb[0].mxu0
    %976 = vmatprep.mubr.f32.mxu0 0.0
    %977 = vmatmul.mubr.f32.gmra.mrb[0].mxu0 %v437
    %v978 = vpop.f32.mrb[0].mxu0
    %v979 = vadd.f32 0.0, %v978
    %v980 = vpop.f32.mrb[0].mxu0
    %981 = vmatprep.mubr.f32.mxu0 0.0
    %982 = vmatmul.mubr.f32.gmra.mrb[0].mxu0 %v440
    %v983 = vpop.f32.mrb[0].mxu0
    %v984 = vadd.f32 0.0, %v983
    %v985 = vpop.f32.mrb[0].mxu0
    %986 = vmatprep.mubr.f32.mxu0 0.0
    %987 = vmatmul.mubr.f32.gmra.mrb[0].mxu0 %v443
    %v988 = vpop.f32.mrb[0].mxu0
    %v989 = vadd.f32 0.0, %v988
    %v990 = vpop.f32.mrb[0].mxu0
    %991 = vmatprep.mubr.f32.mxu0 0.0
    %992 = vmatmul.mubr.f32.gmra.mrb[0].mxu0 %v446
    %v993 = vpop.f32.mrb[0].mxu0
    %v994 = vadd.f32 0.0, %v993
    %v995 = vpop.f32.mrb[0].mxu0
    %996 = vmatprep.mubr.f32.mxu0 0.0
    %997 = vmatmul.mubr.f32.gmra.mrb[0].mxu0 %v449
    %v998 = vpop.f32.mrb[0].mxu0
    %v999 = vadd.f32 0.0, %v998
    %v1000 = vpop.f32.mrb[0].mxu0
    %1001 = vmatprep.mubr.f32.mxu0 0.0
    %1002 = vmatmul.mubr.f32.gmra.mrb[0].mxu0 %v452
    %v1003 = vpop.f32.mrb[0].mxu0
    %v1004 = vadd.f32 0.0, %v1003
    %v1005 = vpop.f32.mrb[0].mxu0
    %1006 = vmatprep.mubr.f32.mxu0 0.0
    %1007 = vmatmul.mubr.f32.gmra.mrb[0].mxu0 %v455
    %v1008 = vpop.f32.mrb[0].mxu0
    %v1009 = vadd.f32 0.0, %v1008
    %v1010 = vpop.f32.mrb[0].mxu0
    %1011 = vmatprep.mubr.f32.mxu0 0.0
    %1012 = vmatmul.mubr.f32.gmra.mrb[0].mxu0 %v458
    %v1013 = vpop.f32.mrb[0].mxu0
    %v1014 = vadd.f32 0.0, %v1013
    %v1015 = vpop.f32.mrb[0].mxu0
    %1016 = vmatprep.mubr.f32.mxu0 0.0
    %1017 = vmatmul.mubr.f32.gmra.mrb[0].mxu0 %v461
    %v1018 = vpop.f32.mrb[0].mxu0
    %v1019 = vadd.f32 0.0, %v1018
    %v1020 = vpop.f32.mrb[0].mxu0
    %1021 = vmatprep.mubr.f32.mxu0 0.0
    %1022 = vmatmul.mubr.f32.gmra.mrb[0].mxu0 %v464
    %v1023 = vpop.f32.mrb[0].mxu0
    %v1024 = vadd.f32 0.0, %v1023
    %v1025 = vpop.f32.mrb[0].mxu0
    %1026 = vmatprep.mubr.f32.mxu0 0.0
    %1027 = vmatmul.mubr.f32.gmra.mrb[0].mxu0 %v467
    %v1028 = vpop.f32.mrb[0].mxu0
    %v1029 = vadd.f32 0.0, %v1028
    %v1030 = vpop.f32.mrb[0].mxu0
    %1031 = vmatprep.mubr.f32.mxu0 0.0
    %1032 = vmatmul.mubr.f32.gmra.mrb[0].mxu0 %v470
    %v1033 = vpop.f32.mrb[0].mxu0
    %v1034 = vadd.f32 0.0, %v1033
    %v1035 = vpop.f32.mrb[0].mxu0
    %1036 = vmatprep.mubr.f32.mxu0 0.0
    %1037 = vmatmul.mubr.f32.gmra.mrb[0].mxu0 %v473
    %v1038 = vpop.f32.mrb[0].mxu0
    %v1039 = vadd.f32 0.0, %v1038
    %v1040 = vpop.f32.mrb[0].mxu0
    %1041 = vmatprep.mubr.f32.mxu0 0.0
    %1042 = vmatmul.mubr.f32.gmra.mrb[0].mxu0 %v476
    %v1043 = vpop.f32.mrb[0].mxu0
    %v1044 = vadd.f32 0.0, %v1043
    %v1045 = vpop.f32.mrb[0].mxu0
    %1046 = vmatprep.mubr.f32.mxu0 0.0
    %1047 = vmatmul.mubr.f32.gmra.mrb[0].mxu0 %v479
    %v1048 = vpop.f32.mrb[0].mxu0
    %v1049 = vadd.f32 0.0, %v1048
    %v1050 = vpop.f32.mrb[0].mxu0
    %1051 = vmatprep.mubr.f32.mxu0 0.0
    %1052 = vmatmul.mubr.f32.gmra.mrb[0].mxu0 %v482
    %v1053 = vpop.f32.mrb[0].mxu0
    %v1054 = vadd.f32 0.0, %v1053
    %v1055 = vpop.f32.mrb[0].mxu0
    %1056 = vmatprep.mubr.f32.mxu0 0.0
    %1057 = vmatmul.mubr.f32.gmra.mrb[0].mxu0 %v485
    %v1058 = vpop.f32.mrb[0].mxu0
    %v1059 = vadd.f32 0.0, %v1058
    %v1060 = vpop.f32.mrb[0].mxu0
    %1061 = vmatprep.mubr.f32.mxu0 0.0
    %1062 = vmatmul.mubr.f32.gmra.mrb[0].mxu0 %v488
    %v1063 = vpop.f32.mrb[0].mxu0
    %v1064 = vadd.f32 0.0, %v1063
    %v1065 = vpop.f32.mrb[0].mxu0
    %1066 = vmatprep.mubr.f32.mxu0 0.0
    %1067 = vmatmul.mubr.f32.gmra.mrb[0].mxu0 %v491
    %v1068 = vpop.f32.mrb[0].mxu0
    %v1069 = vadd.f32 0.0, %v1068
    %v1070 = vpop.f32.mrb[0].mxu0
    %1071 = vmatprep.mubr.f32.mxu0 0.0
    %1072 = vmatmul.mubr.f32.gmra.mrb[0].mxu0 %v494
    %v1073 = vpop.f32.mrb[0].mxu0
    %v1074 = vadd.f32 0.0, %v1073
    %v1075 = vpop.f32.mrb[0].mxu0
    %1076 = vmatprep.mubr.f32.mxu0 0.0
    %1077 = vmatmul.mubr.f32.gmra.mrb[0].mxu0 %v497
    %v1078 = vpop.f32.mrb[0].mxu0
    %v1079 = vadd.f32 0.0, %v1078
    %v1080 = vpop.f32.mrb[0].mxu0
    %1081 = vmatprep.mubr.f32.mxu0 0.0
    %1082 = vmatmul.mubr.f32.gmra.mrb[0].mxu0 %v500
    %v1083 = vpop.f32.mrb[0].mxu0
    %v1084 = vadd.f32 0.0, %v1083
    %v1085 = vpop.f32.mrb[0].mxu0
    %1086 = vmatprep.mubr.f32.mxu0 0.0
    %1087 = vmatmul.mubr.f32.gmra.mrb[0].mxu0 %v503
    %v1088 = vpop.f32.mrb[0].mxu0
    %v1089 = vadd.f32 0.0, %v1088
    %v1090 = vpop.f32.mrb[0].mxu0
    %1091 = vmatprep.mubr.f32.mxu0 0.0
    %1092 = vmatmul.mubr.f32.gmra.mrb[0].mxu0 %v506
    %v1093 = vpop.f32.mrb[0].mxu0
    %v1094 = vadd.f32 0.0, %v1093
    %v1095 = vpop.f32.mrb[0].mxu0
    %1096 = vmatprep.mubr.f32.mxu0 0.0
    %1097 = vmatmul.mubr.f32.gmra.mrb[0].mxu0 %v509
    %v1098 = vpop.f32.mrb[0].mxu0
    %v1099 = vadd.f32 0.0, %v1098
    %v1100 = vpop.f32.mrb[0].mxu0
    %1101 = vmatprep.mubr.f32.mxu0 0.0
    %1102 = vmatmul.mubr.f32.gmra.mrb[0].mxu0 %v512
    %v1103 = vpop.f32.mrb[0].mxu0
    %v1104 = vadd.f32 0.0, %v1103
    %v1105 = vpop.f32.mrb[0].mxu0
    %1106 = vmatprep.mubr.f32.mxu0 0.0
    %1107 = vmatmul.mubr.f32.gmra.mrb[0].mxu0 %v515
    %v1108 = vpop.f32.mrb[0].mxu0
    %v1109 = vadd.f32 0.0, %v1108
    %v1110 = vpop.f32.mrb[0].mxu0
    %1111 = vmatprep.mubr.f32.mxu0 0.0
    %1112 = vmatmul.mubr.f32.gmra.mrb[0].mxu0 %v518
    %v1113 = vpop.f32.mrb[0].mxu0
    %v1114 = vadd.f32 0.0, %v1113
    %v1115 = vpop.f32.mrb[0].mxu0
    %1116 = vmatprep.mubr.f32.mxu0 0.0
    %1117 = vmatmul.mubr.f32.gmra.mrb[0].mxu0 %v521
    %v1118 = vpop.f32.mrb[0].mxu0
    %v1119 = vadd.f32 0.0, %v1118
    %v1120 = vpop.f32.mrb[0].mxu0
    %1121 = vmatprep.mubr.f32.mxu0 0.0
    %1122 = vmatmul.mubr.f32.gmra.mrb[0].mxu0 %v524
    %v1123 = vpop.f32.mrb[0].mxu0
    %v1124 = vadd.f32 0.0, %v1123
    %v1125 = vpop.f32.mrb[0].mxu0
    %1126 = vmatprep.mubr.f32.mxu0 0.0
    %1127 = vmatmul.mubr.f32.gmra.mrb[0].mxu0 %v527
    %v1128 = vpop.f32.mrb[0].mxu0
    %v1129 = vadd.f32 0.0, %v1128
    %v1130 = vpop.f32.mrb[0].mxu0
    %1131 = vmatprep.mubr.f32.mxu0 0.0
    %1132 = vmatmul.mubr.f32.gmra.mrb[0].mxu0 %v530
    %v1133 = vpop.f32.mrb[0].mxu0
    %v1134 = vadd.f32 0.0, %v1133
    %v1135 = vpop.f32.mrb[0].mxu0
    %1136 = vmatprep.mubr.f32.mxu0 0.0
    %1137 = vmatmul.mubr.f32.gmra.mrb[0].mxu0 %v533
    %v1138 = vpop.f32.mrb[0].mxu0
    %v1139 = vadd.f32 0.0, %v1138
    %v1140 = vpop.f32.mrb[0].mxu0
    %1141 = vmatprep.mubr.f32.mxu0 0.0
    %1142 = vmatmul.mubr.f32.gmra.mrb[0].mxu0 %v536
    %v1143 = vpop.f32.mrb[0].mxu0
    %v1144 = vadd.f32 0.0, %v1143
    %v1145 = vpop.f32.mrb[0].mxu0
    %1146 = vmatprep.mubr.f32.mxu0 0.0
    %1147 = vmatmul.mubr.f32.gmra.mrb[0].mxu0 %v539
    %v1148 = vpop.f32.mrb[0].mxu0
    %v1149 = vadd.f32 0.0, %v1148
    %v1150 = vpop.f32.mrb[0].mxu0
    %1151 = vmatprep.mubr.f32.mxu0 0.0
    %1152 = vmatmul.mubr.f32.gmra.mrb[0].mxu0 %v542
    %v1153 = vpop.f32.mrb[0].mxu0
    %v1154 = vadd.f32 0.0, %v1153
    %v1155 = vpop.f32.mrb[0].mxu0
    %1156 = vmatprep.mubr.f32.mxu0 0.0
    %1157 = vmatmul.mubr.f32.gmra.mrb[0].mxu0 %v545
    %v1158 = vpop.f32.mrb[0].mxu0
    %v1159 = vadd.f32 0.0, %v1158
    %v1160 = vpop.f32.mrb[0].mxu0
    %1161 = vmatprep.mubr.f32.mxu0 0.0
    %1162 = vmatmul.mubr.f32.gmra.mrb[0].mxu0 %v548
    %v1163 = vpop.f32.mrb[0].mxu0
    %v1164 = vadd.f32 0.0, %v1163
    %v1165 = vpop.f32.mrb[0].mxu0
    %1166 = vmatprep.mubr.f32.mxu0 0.0
    %1167 = vmatmul.mubr.f32.gmra.mrb[0].mxu0 %v551
    %v1168 = vpop.f32.mrb[0].mxu0
    %v1169 = vadd.f32 0.0, %v1168
    %v1170 = vpop.f32.mrb[0].mxu0
    %1171 = vmatprep.mubr.f32.mxu0 0.0
    %1172 = vmatmul.mubr.f32.gmra.mrb[0].mxu0 %v554
    %v1173 = vpop.f32.mrb[0].mxu0
    %v1174 = vadd.f32 0.0, %v1173
    %v1175 = vpop.f32.mrb[0].mxu0
    %1176 = vmatprep.mubr.f32.mxu0 0.0
    %1177 = vmatmul.mubr.f32.gmra.mrb[0].mxu0 %v557
    %v1178 = vpop.f32.mrb[0].mxu0
    %v1179 = vadd.f32 0.0, %v1178
    %v1180 = vpop.f32.mrb[0].mxu0
    %1181 = vmatprep.mubr.f32.mxu0 0.0
    %1182 = vmatmul.mubr.f32.gmra.mrb[0].mxu0 %v560
    %v1183 = vpop.f32.mrb[0].mxu0
    %v1184 = vadd.f32 0.0, %v1183
    %v1185 = vpop.f32.mrb[0].mxu0
    %1186 = vmatprep.mubr.f32.mxu0 0.0
    %1187 = vmatmul.mubr.f32.gmra.mrb[0].mxu0 %v563
    %v1188 = vpop.f32.mrb[0].mxu0
    %v1189 = vadd.f32 0.0, %v1188
    %v1190 = vpop.f32.mrb[0].mxu0
    %1191 = vmatprep.mubr.f32.mxu0 0.0
    %1192 = vmatmul.mubr.f32.gmra.mrb[0].mxu0 %v566
    %v1193 = vpop.f32.mrb[0].mxu0
    %v1194 = vadd.f32 0.0, %v1193
    %v1195 = vpop.f32.mrb[0].mxu0
    %1196 = vmatprep.mubr.f32.mxu0 0.0
    %1197 = vmatmul.mubr.f32.gmra.mrb[0].mxu0 %v569
    %v1198 = vpop.f32.mrb[0].mxu0
    %v1199 = vadd.f32 0.0, %v1198
    %v1200 = vpop.f32.mrb[0].mxu0
    %1201 = vmatprep.mubr.f32.mxu0 0.0
    %1202 = vmatmul.mubr.f32.gmra.mrb[0].mxu0 %v572
    %v1203 = vpop.f32.mrb[0].mxu0
    %v1204 = vadd.f32 0.0, %v1203
    %v1205 = vpop.f32.mrb[0].mxu0
    %1206 = vmatprep.mubr.f32.mxu0 0.0
    %1207 = vmatmul.mubr.f32.gmra.mrb[0].mxu0 %v575
    %v1208 = vpop.f32.mrb[0].mxu0
    %v1209 = vadd.f32 0.0, %v1208
    %v1210 = vpop.f32.mrb[0].mxu0
    %1211 = vmatprep.mubr.f32.mxu0 0.0
    %1212 = vmatmul.mubr.f32.gmra.mrb[0].mxu0 %v578
    %v1213 = vpop.f32.mrb[0].mxu0
    %v1214 = vadd.f32 0.0, %v1213
    %v1215 = vpop.f32.mrb[0].mxu0
    %1216 = vmatprep.mubr.f32.mxu0 0.0
    %1217 = vmatmul.mubr.f32.gmra.mrb[0].mxu0 %v581
    %v1218 = vpop.f32.mrb[0].mxu0
    %v1219 = vadd.f32 0.0, %v1218
    %v1220 = vpop.f32.mrb[0].mxu0
    %1221 = vmatprep.mubr.f32.mxu0 0.0
    %1222 = vmatmul.mubr.f32.gmra.mrb[0].mxu0 %v584
    %v1223 = vpop.f32.mrb[0].mxu0
    %v1224 = vadd.f32 0.0, %v1223
    %v1225 = vpop.f32.mrb[0].mxu0
    %1226 = vmatprep.mubr.f32.mxu0 0.0
    %1227 = vmatmul.mubr.f32.gmra.mrb[0].mxu0 %v587
    %v1228 = vpop.f32.mrb[0].mxu0
    %v1229 = vadd.f32 0.0, %v1228
    %v1230 = vpop.f32.mrb[0].mxu0
    %1231 = vmatprep.mubr.f32.mxu0 0.0
    %1232 = vmatmul.mubr.f32.gmra.mrb[0].mxu0 %v590
    %v1233 = vpop.f32.mrb[0].mxu0
    %v1234 = vadd.f32 0.0, %v1233
    %v1235 = vpop.f32.mrb[0].mxu0
    %1236 = vmatprep.mubr.f32.mxu0 0.0
    %1237 = vmatmul.mubr.f32.gmra.mrb[0].mxu0 %v593
    %v1238 = vpop.f32.mrb[0].mxu0
    %v1239 = vadd.f32 0.0, %v1238
    %v1240 = vpop.f32.mrb[0].mxu0
    %1241 = vmatprep.mubr.f32.mxu0 0.0
    %1242 = vmatmul.mubr.f32.gmra.mrb[0].mxu0 %v596
    %v1243 = vpop.f32.mrb[0].mxu0
    %v1244 = vadd.f32 0.0, %v1243
    %v1245 = vpop.f32.mrb[0].mxu0
    %1246 = vmatprep.mubr.f32.mxu0 0.0
    %1247 = vmatmul.mubr.f32.gmra.mrb[0].mxu0 %v599
    %v1248 = vpop.f32.mrb[0].mxu0
    %v1249 = vadd.f32 0.0, %v1248
    %v1250 = vpop.f32.mrb[0].mxu0
    %1251 = vmatprep.mubr.f32.mxu0 0.0
    %1252 = vmatmul.mubr.f32.gmra.mrb[0].mxu0 %v602
    %v1253 = vpop.f32.mrb[0].mxu0
    %v1254 = vadd.f32 0.0, %v1253
    %v1255 = vpop.f32.mrb[0].mxu0
    %1256 = vmatprep.mubr.f32.mxu0 0.0
    %1257 = vmatmul.mubr.f32.gmra.mrb[0].mxu0 %v605
    %v1258 = vpop.f32.mrb[0].mxu0
    %v1259 = vadd.f32 0.0, %v1258
    %v1260 = vpop.f32.mrb[0].mxu0
    %1261 = vmatprep.mubr.f32.mxu0 0.0
    %1262 = vmatmul.mubr.f32.gmra.mrb[0].mxu0 %v608
    %v1263 = vpop.f32.mrb[0].mxu0
    %v1264 = vadd.f32 0.0, %v1263
    %v1265 = vpop.f32.mrb[0].mxu0
    %1266 = vmatprep.mubr.f32.mxu0 0.0
    %1267 = vmatmul.mubr.f32.gmra.mrb[0].mxu0 %v611
    %v1268 = vpop.f32.mrb[0].mxu0
    %v1269 = vadd.f32 0.0, %v1268
    %v1270 = vpop.f32.mrb[0].mxu0
    %1271 = vmatprep.mubr.f32.mxu0 0.0
    %1272 = vmatmul.mubr.f32.gmra.mrb[0].mxu0 %v614
    %v1273 = vpop.f32.mrb[0].mxu0
    %v1274 = vadd.f32 0.0, %v1273
    %v1275 = vpop.f32.mrb[0].mxu0
    %1276 = vmatprep.mubr.f32.mxu0 0.0
    %1277 = vmatmul.mubr.f32.gmra.mrb[0].mxu0 %v617
    %v1278 = vpop.f32.mrb[0].mxu0
    %v1279 = vadd.f32 0.0, %v1278
    %v1280 = vpop.f32.mrb[0].mxu0
    %1281 = vmatprep.mubr.f32.mxu0 0.0
    %1282 = vmatmul.mubr.f32.gmra.mrb[0].mxu0 %v620
    %v1283 = vpop.f32.mrb[0].mxu0
    %v1284 = vadd.f32 0.0, %v1283
    %v1285 = vpop.f32.mrb[0].mxu0
    %1286 = vmatprep.mubr.f32.mxu0 0.0
    %1287 = vmatmul.mubr.f32.gmra.mrb[0].mxu0 %v623
    %v1288 = vpop.f32.mrb[0].mxu0
    %v1289 = vadd.f32 0.0, %v1288
    %v1290 = vpop.f32.mrb[0].mxu0
    %1291 = vmatprep.mubr.f32.mxu0 0.0
    %1292 = vmatmul.mubr.f32.gmra.mrb[0].mxu0 %v626
    %v1293 = vpop.f32.mrb[0].mxu0
    %v1294 = vadd.f32 0.0, %v1293
    %v1295 = vpop.f32.mrb[0].mxu0
    %1296 = vmatprep.mubr.f32.mxu0 0.0
    %1297 = vmatmul.mubr.f32.gmra.mrb[0].mxu0 %v629
    %v1298 = vpop.f32.mrb[0].mxu0
    %v1299 = vadd.f32 0.0, %v1298
    %v1300 = vpop.f32.mrb[0].mxu0
    %1301 = vmatprep.mubr.f32.mxu0 0.0
    %1302 = vmatmul.mubr.f32.gmra.mrb[0].mxu0 %v632
    %v1303 = vpop.f32.mrb[0].mxu0
    %v1304 = vadd.f32 0.0, %v1303
    %v1305 = vpop.f32.mrb[0].mxu0
    %1306 = vmatprep.mubr.f32.mxu0 0.0
    %1307 = vmatmul.mubr.f32.gmra.mrb[0].mxu0 %v635
    %v1308 = vpop.f32.mrb[0].mxu0
    %v1309 = vadd.f32 0.0, %v1308
    %v1310 = vpop.f32.mrb[0].mxu0
    %1311 = vmatprep.mubr.f32.mxu0 0.0
    %1312 = vmatmul.mubr.f32.gmra.mrb[0].mxu0 %v638
    %v1313 = vpop.f32.mrb[0].mxu0
    %v1314 = vadd.f32 0.0, %v1313
    %v1315 = vpop.f32.mrb[0].mxu0
    %1316 = vmatprep.mubr.f32.mxu0 0.0
    %1317 = vmatmul.mubr.f32.gmra.mrb[0].mxu0 %v641
    %v1318 = vpop.f32.mrb[0].mxu0
    %v1319 = vadd.f32 0.0, %v1318
    %v1320 = vpop.f32.mrb[0].mxu0
    %1321 = vmatprep.mubr.f32.mxu0 0.0
    %1322 = vmatmul.mubr.f32.gmra.mrb[0].mxu0 %v644
    %v1323 = vpop.f32.mrb[0].mxu0
    %v1324 = vadd.f32 0.0, %v1323
    %v1325 = vpop.f32.mrb[0].mxu0
    %1326 = vmatprep.mubr.f32.mxu0 0.0
    %1327 = vmatmul.mubr.f32.gmra.mrb[0].mxu0 %v647
    %v1328 = vpop.f32.mrb[0].mxu0
    %v1329 = vadd.f32 0.0, %v1328
    %v1330 = vpop.f32.mrb[0].mxu0
    %1331 = vmatprep.mubr.f32.mxu0 0.0
    %1332 = vmatmul.mubr.f32.gmra.mrb[0].mxu0 %v650
    %v1333 = vpop.f32.mrb[0].mxu0
    %v1334 = vadd.f32 0.0, %v1333
    %v1335 = vpop.f32.mrb[0].mxu0
    %1336 = vmatprep.mubr.f32.mxu0 0.0
    %1337 = vmatmul.mubr.f32.gmra.mrb[0].mxu0 %v653
    %v1338 = vpop.f32.mrb[0].mxu0
    %v1339 = vadd.f32 0.0, %v1338
    %v1340 = vpop.f32.mrb[0].mxu0
    %1341 = vmatprep.mubr.f32.mxu0 0.0
    %1342 = vmatmul.mubr.f32.gmra.mrb[0].mxu0 %v656
    %v1343 = vpop.f32.mrb[0].mxu0
    %v1344 = vadd.f32 0.0, %v1343
    %v1345 = vpop.f32.mrb[0].mxu0
    %1346 = vmatprep.mubr.f32.mxu0 0.0
    %1347 = vmatmul.mubr.f32.gmra.mrb[0].mxu0 %v659
    %v1348 = vpop.f32.mrb[0].mxu0
    %v1349 = vadd.f32 0.0, %v1348
    %v1350 = vpop.f32.mrb[0].mxu0
    %1351 = vmatprep.mubr.f32.mxu0 0.0
    %1352 = vmatmul.mubr.f32.gmra.mrb[0].mxu0 %v662
    %v1353 = vpop.f32.mrb[0].mxu0
    %v1354 = vadd.f32 0.0, %v1353
    %v1355 = vpop.f32.mrb[0].mxu0
    %1356 = vmatprep.mubr.f32.mxu0 0.0
    %1357 = vmatmul.mubr.f32.gmra.mrb[0].mxu0 %v665
    %v1358 = vpop.f32.mrb[0].mxu0
    %v1359 = vadd.f32 0.0, %v1358
    %v1360 = vpop.f32.mrb[0].mxu0
    %1361 = vmatprep.mubr.f32.mxu0 0.0
    %1362 = vmatmul.mubr.f32.gmra.mrb[0].mxu0 %v668
    %v1363 = vpop.f32.mrb[0].mxu0
    %v1364 = vadd.f32 0.0, %v1363
    %v1365 = vpop.f32.mrb[0].mxu0
    %1366 = vmatprep.mubr.f32.mxu0 0.0
    %1367 = vmatmul.mubr.f32.gmra.mrb[0].mxu0 %v671
    %v1368 = vpop.f32.mrb[0].mxu0
    %v1369 = vadd.f32 0.0, %v1368
    %v1370 = vpop.f32.mrb[0].mxu0
    %1371 = vmatprep.mubr.f32.mxu0 0.0
    %1372 = vmatmul.mubr.f32.gmra.mrb[0].mxu0 %v674
    %v1373 = vpop.f32.mrb[0].mxu0
    %v1374 = vadd.f32 0.0, %v1373
    %v1375 = vpop.f32.mrb[0].mxu0
    %1376 = vmatprep.mubr.f32.mxu0 0.0
    %1377 = vmatmul.mubr.f32.gmra.mrb[0].mxu0 %v677
    %v1378 = vpop.f32.mrb[0].mxu0
    %v1379 = vadd.f32 0.0, %v1378
    %v1380 = vpop.f32.mrb[0].mxu0
    %1381 = vmatprep.mubr.f32.mxu0 0.0
    %1382 = vmatmul.mubr.f32.gmra.mrb[0].mxu0 %v680
    %v1383 = vpop.f32.mrb[0].mxu0
    %v1384 = vadd.f32 0.0, %v1383
    %v1385 = vpop.f32.mrb[0].mxu0
    %1386 = vdwg.mxu0
    %v1387 = vld [vmem:[#allocation2] sm:$0xff]
    %v1388 = vadd.f32 %v749, %v1387
    %v1389 = vadd.f32 %v754, %v1387
    %v1390 = vadd.f32 %v759, %v1387
    %v1391 = vadd.f32 %v764, %v1387
    %v1392 = vadd.f32 %v769, %v1387
    %v1393 = vadd.f32 %v774, %v1387
    %v1394 = vadd.f32 %v779, %v1387
    %v1395 = vadd.f32 %v784, %v1387
    %v1396 = vadd.f32 %v789, %v1387
    %v1397 = vadd.f32 %v794, %v1387
    %v1398 = vadd.f32 %v799, %v1387
    %v1399 = vadd.f32 %v804, %v1387
    %v1400 = vadd.f32 %v809, %v1387
    %v1401 = vadd.f32 %v814, %v1387
    %v1402 = vadd.f32 %v819, %v1387
    %v1403 = vadd.f32 %v824, %v1387
    %v1404 = vadd.f32 %v829, %v1387
    %v1405 = vadd.f32 %v834, %v1387
    %v1406 = vadd.f32 %v839, %v1387
    %v1407 = vadd.f32 %v844, %v1387
    %v1408 = vadd.f32 %v849, %v1387
    %v1409 = vadd.f32 %v854, %v1387
    %v1410 = vadd.f32 %v859, %v1387
    %v1411 = vadd.f32 %v864, %v1387
    %v1412 = vadd.f32 %v869, %v1387
    %v1413 = vadd.f32 %v874, %v1387
    %v1414 = vadd.f32 %v879, %v1387
    %v1415 = vadd.f32 %v884, %v1387
    %v1416 = vadd.f32 %v889, %v1387
    %v1417 = vadd.f32 %v894, %v1387
    %v1418 = vadd.f32 %v899, %v1387
    %v1419 = vadd.f32 %v904, %v1387
    %v1420 = vadd.f32 %v909, %v1387
    %v1421 = vadd.f32 %v914, %v1387
    %v1422 = vadd.f32 %v919, %v1387
    %v1423 = vadd.f32 %v924, %v1387
    %v1424 = vadd.f32 %v929, %v1387
    %v1425 = vadd.f32 %v934, %v1387
    %v1426 = vadd.f32 %v939, %v1387
    %v1427 = vadd.f32 %v944, %v1387
    %v1428 = vadd.f32 %v949, %v1387
    %v1429 = vadd.f32 %v954, %v1387
    %v1430 = vadd.f32 %v959, %v1387
    %v1431 = vadd.f32 %v964, %v1387
    %v1432 = vadd.f32 %v969, %v1387
    %v1433 = vadd.f32 %v974, %v1387
    %v1434 = vadd.f32 %v979, %v1387
    %v1435 = vadd.f32 %v984, %v1387
    %v1436 = vadd.f32 %v989, %v1387
    %v1437 = vadd.f32 %v994, %v1387
    %v1438 = vadd.f32 %v999, %v1387
    %v1439 = vadd.f32 %v1004, %v1387
    %v1440 = vadd.f32 %v1009, %v1387
    %v1441 = vadd.f32 %v1014, %v1387
    %v1442 = vadd.f32 %v1019, %v1387
    %v1443 = vadd.f32 %v1024, %v1387
    %v1444 = vadd.f32 %v1029, %v1387
    %v1445 = vadd.f32 %v1034, %v1387
    %v1446 = vadd.f32 %v1039, %v1387
    %v1447 = vadd.f32 %v1044, %v1387
    %v1448 = vadd.f32 %v1049, %v1387
    %v1449 = vadd.f32 %v1054, %v1387
    %v1450 = vadd.f32 %v1059, %v1387
    %v1451 = vadd.f32 %v1064, %v1387
    %v1452 = vadd.f32 %v1069, %v1387
    %v1453 = vadd.f32 %v1074, %v1387
    %v1454 = vadd.f32 %v1079, %v1387
    %v1455 = vadd.f32 %v1084, %v1387
    %v1456 = vadd.f32 %v1089, %v1387
    %v1457 = vadd.f32 %v1094, %v1387
    %v1458 = vadd.f32 %v1099, %v1387
    %v1459 = vadd.f32 %v1104, %v1387
    %v1460 = vadd.f32 %v1109, %v1387
    %v1461 = vadd.f32 %v1114, %v1387
    %v1462 = vadd.f32 %v1119, %v1387
    %v1463 = vadd.f32 %v1124, %v1387
    %v1464 = vadd.f32 %v1129, %v1387
    %v1465 = vadd.f32 %v1134, %v1387
    %v1466 = vadd.f32 %v1139, %v1387
    %v1467 = vadd.f32 %v1144, %v1387
    %v1468 = vadd.f32 %v1149, %v1387
    %v1469 = vadd.f32 %v1154, %v1387
    %v1470 = vadd.f32 %v1159, %v1387
    %v1471 = vadd.f32 %v1164, %v1387
    %v1472 = vadd.f32 %v1169, %v1387
    %v1473 = vadd.f32 %v1174, %v1387
    %v1474 = vadd.f32 %v1179, %v1387
    %v1475 = vadd.f32 %v1184, %v1387
    %v1476 = vadd.f32 %v1189, %v1387
    %v1477 = vadd.f32 %v1194, %v1387
    %v1478 = vadd.f32 %v1199, %v1387
    %v1479 = vadd.f32 %v1204, %v1387
    %v1480 = vadd.f32 %v1209, %v1387
    %v1481 = vadd.f32 %v1214, %v1387
    %v1482 = vadd.f32 %v1219, %v1387
    %v1483 = vadd.f32 %v1224, %v1387
    %v1484 = vadd.f32 %v1229, %v1387
    %v1485 = vadd.f32 %v1234, %v1387
    %v1486 = vadd.f32 %v1239, %v1387
    %v1487 = vadd.f32 %v1244, %v1387
    %v1488 = vadd.f32 %v1249, %v1387
    %v1489 = vadd.f32 %v1254, %v1387
    %v1490 = vadd.f32 %v1259, %v1387
    %v1491 = vadd.f32 %v1264, %v1387
    %v1492 = vadd.f32 %v1269, %v1387
    %v1493 = vadd.f32 %v1274, %v1387
    %v1494 = vadd.f32 %v1279, %v1387
    %v1495 = vadd.f32 %v1284, %v1387
    %v1496 = vadd.f32 %v1289, %v1387
    %v1497 = vadd.f32 %v1294, %v1387
    %v1498 = vadd.f32 %v1299, %v1387
    %v1499 = vadd.f32 %v1304, %v1387
    %v1500 = vadd.f32 %v1309, %v1387
    %v1501 = vadd.f32 %v1314, %v1387
    %v1502 = vadd.f32 %v1319, %v1387
    %v1503 = vadd.f32 %v1324, %v1387
    %v1504 = vadd.f32 %v1329, %v1387
    %v1505 = vadd.f32 %v1334, %v1387
    %v1506 = vadd.f32 %v1339, %v1387
    %v1507 = vadd.f32 %v1344, %v1387
    %v1508 = vadd.f32 %v1349, %v1387
    %v1509 = vadd.f32 %v1354, %v1387
    %v1510 = vadd.f32 %v1359, %v1387
    %v1511 = vadd.f32 %v1364, %v1387
    %v1512 = vadd.f32 %v1369, %v1387
    %v1513 = vadd.f32 %v1374, %v1387
    %v1514 = vadd.f32 %v1379, %v1387
    %v1515 = vadd.f32 %v1384, %v1387
    %v1516 = vtanh.pop %v1388
    %v1517 = vtanh.pop %v1389
    %v1518 = vtanh.pop %v1390
    %v1519 = vtanh.pop %v1391
    %v1520 = vtanh.pop %v1392
    %v1521 = vtanh.pop %v1393
    %v1522 = vtanh.pop %v1394
    %v1523 = vtanh.pop %v1395
    %v1524 = vtanh.pop %v1396
    %v1525 = vtanh.pop %v1397
    %v1526 = vtanh.pop %v1398
    %v1527 = vtanh.pop %v1399
    %v1528 = vtanh.pop %v1400
    %v1529 = vtanh.pop %v1401
    %v1530 = vtanh.pop %v1402
    %v1531 = vtanh.pop %v1403
    %v1532 = vtanh.pop %v1404
    %v1533 = vtanh.pop %v1405
    %v1534 = vtanh.pop %v1406
    %v1535 = vtanh.pop %v1407
    %v1536 = vtanh.pop %v1408
    %v1537 = vtanh.pop %v1409
    %v1538 = vtanh.pop %v1410
    %v1539 = vtanh.pop %v1411
    %v1540 = vtanh.pop %v1412
    %v1541 = vtanh.pop %v1413
    %v1542 = vtanh.pop %v1414
    %v1543 = vtanh.pop %v1415
    %v1544 = vtanh.pop %v1416
    %v1545 = vtanh.pop %v1417
    %v1546 = vtanh.pop %v1418
    %v1547 = vtanh.pop %v1419
    %v1548 = vtanh.pop %v1420
    %v1549 = vtanh.pop %v1421
    %v1550 = vtanh.pop %v1422
    %v1551 = vtanh.pop %v1423
    %v1552 = vtanh.pop %v1424
    %v1553 = vtanh.pop %v1425
    %v1554 = vtanh.pop %v1426
    %v1555 = vtanh.pop %v1427
    %v1556 = vtanh.pop %v1428
    %v1557 = vtanh.pop %v1429
    %v1558 = vtanh.pop %v1430
    %v1559 = vtanh.pop %v1431
    %v1560 = vtanh.pop %v1432
    %v1561 = vtanh.pop %v1433
    %v1562 = vtanh.pop %v1434
    %v1563 = vtanh.pop %v1435
    %v1564 = vtanh.pop %v1436
    %v1565 = vtanh.pop %v1437
    %v1566 = vtanh.pop %v1438
    %v1567 = vtanh.pop %v1439
    %v1568 = vtanh.pop %v1440
    %v1569 = vtanh.pop %v1441
    %v1570 = vtanh.pop %v1442
    %v1571 = vtanh.pop %v1443
    %v1572 = vtanh.pop %v1444
    %v1573 = vtanh.pop %v1445
    %v1574 = vtanh.pop %v1446
    %v1575 = vtanh.pop %v1447
    %v1576 = vtanh.pop %v1448
    %v1577 = vtanh.pop %v1449
    %v1578 = vtanh.pop %v1450
    %v1579 = vtanh.pop %v1451
    %v1580 = vtanh.pop %v1452
    %v1581 = vtanh.pop %v1453
    %v1582 = vtanh.pop %v1454
    %v1583 = vtanh.pop %v1455
    %v1584 = vtanh.pop %v1456
    %v1585 = vtanh.pop %v1457
    %v1586 = vtanh.pop %v1458
    %v1587 = vtanh.pop %v1459
    %v1588 = vtanh.pop %v1460
    %v1589 = vtanh.pop %v1461
    %v1590 = vtanh.pop %v1462
    %v1591 = vtanh.pop %v1463
    %v1592 = vtanh.pop %v1464
    %v1593 = vtanh.pop %v1465
    %v1594 = vtanh.pop %v1466
    %v1595 = vtanh.pop %v1467
    %v1596 = vtanh.pop %v1468
    %v1597 = vtanh.pop %v1469
    %v1598 = vtanh.pop %v1470
    %v1599 = vtanh.pop %v1471
    %v1600 = vtanh.pop %v1472
    %v1601 = vtanh.pop %v1473
    %v1602 = vtanh.pop %v1474
    %v1603 = vtanh.pop %v1475
    %v1604 = vtanh.pop %v1476
    %v1605 = vtanh.pop %v1477
    %v1606 = vtanh.pop %v1478
    %v1607 = vtanh.pop %v1479
    %v1608 = vtanh.pop %v1480
    %v1609 = vtanh.pop %v1481
    %v1610 = vtanh.pop %v1482
    %v1611 = vtanh.pop %v1483
    %v1612 = vtanh.pop %v1484
    %v1613 = vtanh.pop %v1485
    %v1614 = vtanh.pop %v1486
    %v1615 = vtanh.pop %v1487
    %v1616 = vtanh.pop %v1488
    %v1617 = vtanh.pop %v1489
    %v1618 = vtanh.pop %v1490
    %v1619 = vtanh.pop %v1491
    %v1620 = vtanh.pop %v1492
    %v1621 = vtanh.pop %v1493
    %v1622 = vtanh.pop %v1494
    %v1623 = vtanh.pop %v1495
    %v1624 = vtanh.pop %v1496
    %v1625 = vtanh.pop %v1497
    %v1626 = vtanh.pop %v1498
    %v1627 = vtanh.pop %v1499
    %v1628 = vtanh.pop %v1500
    %v1629 = vtanh.pop %v1501
    %v1630 = vtanh.pop %v1502
    %v1631 = vtanh.pop %v1503
    %v1632 = vtanh.pop %v1504
    %v1633 = vtanh.pop %v1505
    %v1634 = vtanh.pop %v1506
    %v1635 = vtanh.pop %v1507
    %v1636 = vtanh.pop %v1508
    %v1637 = vtanh.pop %v1509
    %v1638 = vtanh.pop %v1510
    %v1639 = vtanh.pop %v1511
    %v1640 = vtanh.pop %v1512
    %v1641 = vtanh.pop %v1513
    %v1642 = vtanh.pop %v1514
    %v1643 = vtanh.pop %v1515
    %1644 = vadd.xlane.f32.xlu0 %v1516
    %v1645 = vpop.xlane.xlu0 %1644
    %1646 = vadd.xlane.f32.xlu0 %v1517
    %v1647 = vpop.xlane.xlu0 %1646
    %1648 = vadd.xlane.f32.xlu0 %v1518
    %v1649 = vpop.xlane.xlu0 %1648
    %1650 = vadd.xlane.f32.xlu0 %v1519
    %v1651 = vpop.xlane.xlu0 %1650
    %1652 = vadd.xlane.f32.xlu0 %v1520
    %v1653 = vpop.xlane.xlu0 %1652
    %1654 = vadd.xlane.f32.xlu0 %v1521
    %v1655 = vpop.xlane.xlu0 %1654
    %1656 = vadd.xlane.f32.xlu0 %v1522
    %v1657 = vpop.xlane.xlu0 %1656
    %1658 = vadd.xlane.f32.xlu0 %v1523
    %v1659 = vpop.xlane.xlu0 %1658
    %1660 = vadd.xlane.f32.xlu0 %v1524
    %v1661 = vpop.xlane.xlu0 %1660
    %1662 = vadd.xlane.f32.xlu0 %v1525
    %v1663 = vpop.xlane.xlu0 %1662
    %1664 = vadd.xlane.f32.xlu0 %v1526
    %v1665 = vpop.xlane.xlu0 %1664
    %1666 = vadd.xlane.f32.xlu0 %v1527
    %v1667 = vpop.xlane.xlu0 %1666
    %1668 = vadd.xlane.f32.xlu0 %v1528
    %v1669 = vpop.xlane.xlu0 %1668
    %1670 = vadd.xlane.f32.xlu0 %v1529
    %v1671 = vpop.xlane.xlu0 %1670
    %1672 = vadd.xlane.f32.xlu0 %v1530
    %v1673 = vpop.xlane.xlu0 %1672
    %1674 = vadd.xlane.f32.xlu0 %v1531
    %v1675 = vpop.xlane.xlu0 %1674
    %1676 = vadd.xlane.f32.xlu0 %v1532
    %v1677 = vpop.xlane.xlu0 %1676
    %1678 = vadd.xlane.f32.xlu0 %v1533
    %v1679 = vpop.xlane.xlu0 %1678
    %1680 = vadd.xlane.f32.xlu0 %v1534
    %v1681 = vpop.xlane.xlu0 %1680
    %1682 = vadd.xlane.f32.xlu0 %v1535
    %v1683 = vpop.xlane.xlu0 %1682
    %1684 = vadd.xlane.f32.xlu0 %v1536
    %v1685 = vpop.xlane.xlu0 %1684
    %1686 = vadd.xlane.f32.xlu0 %v1537
    %v1687 = vpop.xlane.xlu0 %1686
    %1688 = vadd.xlane.f32.xlu0 %v1538
    %v1689 = vpop.xlane.xlu0 %1688
    %1690 = vadd.xlane.f32.xlu0 %v1539
    %v1691 = vpop.xlane.xlu0 %1690
    %1692 = vadd.xlane.f32.xlu0 %v1540
    %v1693 = vpop.xlane.xlu0 %1692
    %1694 = vadd.xlane.f32.xlu0 %v1541
    %v1695 = vpop.xlane.xlu0 %1694
    %1696 = vadd.xlane.f32.xlu0 %v1542
    %v1697 = vpop.xlane.xlu0 %1696
    %1698 = vadd.xlane.f32.xlu0 %v1543
    %v1699 = vpop.xlane.xlu0 %1698
    %1700 = vadd.xlane.f32.xlu0 %v1544
    %v1701 = vpop.xlane.xlu0 %1700
    %1702 = vadd.xlane.f32.xlu0 %v1545
    %v1703 = vpop.xlane.xlu0 %1702
    %1704 = vadd.xlane.f32.xlu0 %v1546
    %v1705 = vpop.xlane.xlu0 %1704
    %1706 = vadd.xlane.f32.xlu0 %v1547
    %v1707 = vpop.xlane.xlu0 %1706
    %1708 = vadd.xlane.f32.xlu0 %v1548
    %v1709 = vpop.xlane.xlu0 %1708
    %1710 = vadd.xlane.f32.xlu0 %v1549
    %v1711 = vpop.xlane.xlu0 %1710
    %1712 = vadd.xlane.f32.xlu0 %v1550
    %v1713 = vpop.xlane.xlu0 %1712
    %1714 = vadd.xlane.f32.xlu0 %v1551
    %v1715 = vpop.xlane.xlu0 %1714
    %1716 = vadd.xlane.f32.xlu0 %v1552
    %v1717 = vpop.xlane.xlu0 %1716
    %1718 = vadd.xlane.f32.xlu0 %v1553
    %v1719 = vpop.xlane.xlu0 %1718
    %1720 = vadd.xlane.f32.xlu0 %v1554
    %v1721 = vpop.xlane.xlu0 %1720
    %1722 = vadd.xlane.f32.xlu0 %v1555
    %v1723 = vpop.xlane.xlu0 %1722
    %1724 = vadd.xlane.f32.xlu0 %v1556
    %v1725 = vpop.xlane.xlu0 %1724
    %1726 = vadd.xlane.f32.xlu0 %v1557
    %v1727 = vpop.xlane.xlu0 %1726
    %1728 = vadd.xlane.f32.xlu0 %v1558
    %v1729 = vpop.xlane.xlu0 %1728
    %1730 = vadd.xlane.f32.xlu0 %v1559
    %v1731 = vpop.xlane.xlu0 %1730
    %1732 = vadd.xlane.f32.xlu0 %v1560
    %v1733 = vpop.xlane.xlu0 %1732
    %1734 = vadd.xlane.f32.xlu0 %v1561
    %v1735 = vpop.xlane.xlu0 %1734
    %1736 = vadd.xlane.f32.xlu0 %v1562
    %v1737 = vpop.xlane.xlu0 %1736
    %1738 = vadd.xlane.f32.xlu0 %v1563
    %v1739 = vpop.xlane.xlu0 %1738
    %1740 = vadd.xlane.f32.xlu0 %v1564
    %v1741 = vpop.xlane.xlu0 %1740
    %1742 = vadd.xlane.f32.xlu0 %v1565
    %v1743 = vpop.xlane.xlu0 %1742
    %1744 = vadd.xlane.f32.xlu0 %v1566
    %v1745 = vpop.xlane.xlu0 %1744
    %1746 = vadd.xlane.f32.xlu0 %v1567
    %v1747 = vpop.xlane.xlu0 %1746
    %1748 = vadd.xlane.f32.xlu0 %v1568
    %v1749 = vpop.xlane.xlu0 %1748
    %1750 = vadd.xlane.f32.xlu0 %v1569
    %v1751 = vpop.xlane.xlu0 %1750
    %1752 = vadd.xlane.f32.xlu0 %v1570
    %v1753 = vpop.xlane.xlu0 %1752
    %1754 = vadd.xlane.f32.xlu0 %v1571
    %v1755 = vpop.xlane.xlu0 %1754
    %1756 = vadd.xlane.f32.xlu0 %v1572
    %v1757 = vpop.xlane.xlu0 %1756
    %1758 = vadd.xlane.f32.xlu0 %v1573
    %v1759 = vpop.xlane.xlu0 %1758
    %1760 = vadd.xlane.f32.xlu0 %v1574
    %v1761 = vpop.xlane.xlu0 %1760
    %1762 = vadd.xlane.f32.xlu0 %v1575
    %v1763 = vpop.xlane.xlu0 %1762
    %1764 = vadd.xlane.f32.xlu0 %v1576
    %v1765 = vpop.xlane.xlu0 %1764
    %1766 = vadd.xlane.f32.xlu0 %v1577
    %v1767 = vpop.xlane.xlu0 %1766
    %1768 = vadd.xlane.f32.xlu0 %v1578
    %v1769 = vpop.xlane.xlu0 %1768
    %1770 = vadd.xlane.f32.xlu0 %v1579
    %v1771 = vpop.xlane.xlu0 %1770
    %1772 = vadd.xlane.f32.xlu0 %v1580
    %v1773 = vpop.xlane.xlu0 %1772
    %1774 = vadd.xlane.f32.xlu0 %v1581
    %v1775 = vpop.xlane.xlu0 %1774
    %1776 = vadd.xlane.f32.xlu0 %v1582
    %v1777 = vpop.xlane.xlu0 %1776
    %1778 = vadd.xlane.f32.xlu0 %v1583
    %v1779 = vpop.xlane.xlu0 %1778
    %1780 = vadd.xlane.f32.xlu0 %v1584
    %v1781 = vpop.xlane.xlu0 %1780
    %1782 = vadd.xlane.f32.xlu0 %v1585
    %v1783 = vpop.xlane.xlu0 %1782
    %1784 = vadd.xlane.f32.xlu0 %v1586
    %v1785 = vpop.xlane.xlu0 %1784
    %1786 = vadd.xlane.f32.xlu0 %v1587
    %v1787 = vpop.xlane.xlu0 %1786
    %1788 = vadd.xlane.f32.xlu0 %v1588
    %v1789 = vpop.xlane.xlu0 %1788
    %1790 = vadd.xlane.f32.xlu0 %v1589
    %v1791 = vpop.xlane.xlu0 %1790
    %1792 = vadd.xlane.f32.xlu0 %v1590
    %v1793 = vpop.xlane.xlu0 %1792
    %1794 = vadd.xlane.f32.xlu0 %v1591
    %v1795 = vpop.xlane.xlu0 %1794
    %1796 = vadd.xlane.f32.xlu0 %v1592
    %v1797 = vpop.xlane.xlu0 %1796
    %1798 = vadd.xlane.f32.xlu0 %v1593
    %v1799 = vpop.xlane.xlu0 %1798
    %1800 = vadd.xlane.f32.xlu0 %v1594
    %v1801 = vpop.xlane.xlu0 %1800
    %1802 = vadd.xlane.f32.xlu0 %v1595
    %v1803 = vpop.xlane.xlu0 %1802
    %1804 = vadd.xlane.f32.xlu0 %v1596
    %v1805 = vpop.xlane.xlu0 %1804
    %1806 = vadd.xlane.f32.xlu0 %v1597
    %v1807 = vpop.xlane.xlu0 %1806
    %1808 = vadd.xlane.f32.xlu0 %v1598
    %v1809 = vpop.xlane.xlu0 %1808
    %1810 = vadd.xlane.f32.xlu0 %v1599
    %v1811 = vpop.xlane.xlu0 %1810
    %1812 = vadd.xlane.f32.xlu0 %v1600
    %v1813 = vpop.xlane.xlu0 %1812
    %1814 = vadd.xlane.f32.xlu0 %v1601
    %v1815 = vpop.xlane.xlu0 %1814
    %1816 = vadd.xlane.f32.xlu0 %v1602
    %v1817 = vpop.xlane.xlu0 %1816
    %1818 = vadd.xlane.f32.xlu0 %v1603
    %v1819 = vpop.xlane.xlu0 %1818
    %1820 = vadd.xlane.f32.xlu0 %v1604
    %v1821 = vpop.xlane.xlu0 %1820
    %1822 = vadd.xlane.f32.xlu0 %v1605
    %v1823 = vpop.xlane.xlu0 %1822
    %1824 = vadd.xlane.f32.xlu0 %v1606
    %v1825 = vpop.xlane.xlu0 %1824
    %1826 = vadd.xlane.f32.xlu0 %v1607
    %v1827 = vpop.xlane.xlu0 %1826
    %1828 = vadd.xlane.f32.xlu0 %v1608
    %v1829 = vpop.xlane.xlu0 %1828
    %1830 = vadd.xlane.f32.xlu0 %v1609
    %v1831 = vpop.xlane.xlu0 %1830
    %1832 = vadd.xlane.f32.xlu0 %v1610
    %v1833 = vpop.xlane.xlu0 %1832
    %1834 = vadd.xlane.f32.xlu0 %v1611
    %v1835 = vpop.xlane.xlu0 %1834
    %1836 = vadd.xlane.f32.xlu0 %v1612
    %v1837 = vpop.xlane.xlu0 %1836
    %1838 = vadd.xlane.f32.xlu0 %v1613
    %v1839 = vpop.xlane.xlu0 %1838
    %1840 = vadd.xlane.f32.xlu0 %v1614
    %v1841 = vpop.xlane.xlu0 %1840
    %1842 = vadd.xlane.f32.xlu0 %v1615
    %v1843 = vpop.xlane.xlu0 %1842
    %1844 = vadd.xlane.f32.xlu0 %v1616
    %v1845 = vpop.xlane.xlu0 %1844
    %1846 = vadd.xlane.f32.xlu0 %v1617
    %v1847 = vpop.xlane.xlu0 %1846
    %1848 = vadd.xlane.f32.xlu0 %v1618
    %v1849 = vpop.xlane.xlu0 %1848
    %1850 = vadd.xlane.f32.xlu0 %v1619
    %v1851 = vpop.xlane.xlu0 %1850
    %1852 = vadd.xlane.f32.xlu0 %v1620
    %v1853 = vpop.xlane.xlu0 %1852
    %1854 = vadd.xlane.f32.xlu0 %v1621
    %v1855 = vpop.xlane.xlu0 %1854
    %1856 = vadd.xlane.f32.xlu0 %v1622
    %v1857 = vpop.xlane.xlu0 %1856
    %1858 = vadd.xlane.f32.xlu0 %v1623
    %v1859 = vpop.xlane.xlu0 %1858
    %1860 = vadd.xlane.f32.xlu0 %v1624
    %v1861 = vpop.xlane.xlu0 %1860
    %1862 = vadd.xlane.f32.xlu0 %v1625
    %v1863 = vpop.xlane.xlu0 %1862
    %1864 = vadd.xlane.f32.xlu0 %v1626
    %v1865 = vpop.xlane.xlu0 %1864
    %1866 = vadd.xlane.f32.xlu0 %v1627
    %v1867 = vpop.xlane.xlu0 %1866
    %1868 = vadd.xlane.f32.xlu0 %v1628
    %v1869 = vpop.xlane.xlu0 %1868
    %1870 = vadd.xlane.f32.xlu0 %v1629
    %v1871 = vpop.xlane.xlu0 %1870
    %1872 = vadd.xlane.f32.xlu0 %v1630
    %v1873 = vpop.xlane.xlu0 %1872
    %1874 = vadd.xlane.f32.xlu0 %v1631
    %v1875 = vpop.xlane.xlu0 %1874
    %1876 = vadd.xlane.f32.xlu0 %v1632
    %v1877 = vpop.xlane.xlu0 %1876
    %1878 = vadd.xlane.f32.xlu0 %v1633
    %v1879 = vpop.xlane.xlu0 %1878
    %1880 = vadd.xlane.f32.xlu0 %v1634
    %v1881 = vpop.xlane.xlu0 %1880
    %1882 = vadd.xlane.f32.xlu0 %v1635
    %v1883 = vpop.xlane.xlu0 %1882
    %1884 = vadd.xlane.f32.xlu0 %v1636
    %v1885 = vpop.xlane.xlu0 %1884
    %1886 = vadd.xlane.f32.xlu0 %v1637
    %v1887 = vpop.xlane.xlu0 %1886
    %1888 = vadd.xlane.f32.xlu0 %v1638
    %v1889 = vpop.xlane.xlu0 %1888
    %1890 = vadd.xlane.f32.xlu0 %v1639
    %v1891 = vpop.xlane.xlu0 %1890
    %1892 = vadd.xlane.f32.xlu0 %v1640
    %v1893 = vpop.xlane.xlu0 %1892
    %1894 = vadd.xlane.f32.xlu0 %v1641
    %v1895 = vpop.xlane.xlu0 %1894
    %1896 = vadd.xlane.f32.xlu0 %v1642
    %v1897 = vpop.xlane.xlu0 %1896
    %1898 = vadd.xlane.f32.xlu0 %v1643
    %v1899 = vpop.xlane.xlu0 %1898
    %v2028 = vlaneseq
    %v2029 = vand.u32 %v2028, 127
    %v2030 = vlaneseq
    %v2031 = vshrl.u32 %v2030, 7
    %v2032 = vsub.s32 %v2029, %v2031
    %v2033 = vrot.slane %v1645, %v2032
    %v2034 = vlaneseq
    %v2035 = vshrl.u32 %v2034, 7
    %v2036 = vsub.s32 %v2029, %v2035
    %v2037 = vrot.slane %v1647, %v2036
    %v2038 = vlaneseq
    %v2039 = vshrl.u32 %v2038, 7
    %v2040 = vsub.s32 %v2029, %v2039
    %v2041 = vrot.slane %v1649, %v2040
    %v2042 = vlaneseq
    %v2043 = vshrl.u32 %v2042, 7
    %v2044 = vsub.s32 %v2029, %v2043
    %v2045 = vrot.slane %v1651, %v2044
    %v2046 = vlaneseq
    %v2047 = vshrl.u32 %v2046, 7
    %v2048 = vsub.s32 %v2029, %v2047
    %v2049 = vrot.slane %v1653, %v2048
    %v2050 = vlaneseq
    %v2051 = vshrl.u32 %v2050, 7
    %v2052 = vsub.s32 %v2029, %v2051
    %v2053 = vrot.slane %v1655, %v2052
    %v2054 = vlaneseq
    %v2055 = vshrl.u32 %v2054, 7
    %v2056 = vsub.s32 %v2029, %v2055
    %v2057 = vrot.slane %v1657, %v2056
    %v2058 = vlaneseq
    %v2059 = vshrl.u32 %v2058, 7
    %v2060 = vsub.s32 %v2029, %v2059
    %v2061 = vrot.slane %v1659, %v2060
    %v2062 = vlaneseq
    %v2063 = vshrl.u32 %v2062, 7
    %v2064 = vsub.s32 %v2029, %v2063
    %v2065 = vrot.slane %v1661, %v2064
    %v2066 = vlaneseq
    %v2067 = vshrl.u32 %v2066, 7
    %v2068 = vsub.s32 %v2029, %v2067
    %v2069 = vrot.slane %v1663, %v2068
    %v2070 = vlaneseq
    %v2071 = vshrl.u32 %v2070, 7
    %v2072 = vsub.s32 %v2029, %v2071
    %v2073 = vrot.slane %v1665, %v2072
    %v2074 = vlaneseq
    %v2075 = vshrl.u32 %v2074, 7
    %v2076 = vsub.s32 %v2029, %v2075
    %v2077 = vrot.slane %v1667, %v2076
    %v2078 = vlaneseq
    %v2079 = vshrl.u32 %v2078, 7
    %v2080 = vsub.s32 %v2029, %v2079
    %v2081 = vrot.slane %v1669, %v2080
    %v2082 = vlaneseq
    %v2083 = vshrl.u32 %v2082, 7
    %v2084 = vsub.s32 %v2029, %v2083
    %v2085 = vrot.slane %v1671, %v2084
    %v2086 = vlaneseq
    %v2087 = vshrl.u32 %v2086, 7
    %v2088 = vsub.s32 %v2029, %v2087
    %v2089 = vrot.slane %v1673, %v2088
    %v2090 = vlaneseq
    %v2091 = vshrl.u32 %v2090, 7
    %v2092 = vsub.s32 %v2029, %v2091
    %v2093 = vrot.slane %v1675, %v2092
    %v2094 = vlaneseq
    %v2095 = vshrl.u32 %v2094, 7
    %v2096 = vsub.s32 %v2029, %v2095
    %v2097 = vrot.slane %v1677, %v2096
    %v2098 = vlaneseq
    %v2099 = vshrl.u32 %v2098, 7
    %v2100 = vsub.s32 %v2029, %v2099
    %v2101 = vrot.slane %v1679, %v2100
    %v2102 = vlaneseq
    %v2103 = vshrl.u32 %v2102, 7
    %v2104 = vsub.s32 %v2029, %v2103
    %v2105 = vrot.slane %v1681, %v2104
    %v2106 = vlaneseq
    %v2107 = vshrl.u32 %v2106, 7
    %v2108 = vsub.s32 %v2029, %v2107
    %v2109 = vrot.slane %v1683, %v2108
    %v2110 = vlaneseq
    %v2111 = vshrl.u32 %v2110, 7
    %v2112 = vsub.s32 %v2029, %v2111
    %v2113 = vrot.slane %v1685, %v2112
    %v2114 = vlaneseq
    %v2115 = vshrl.u32 %v2114, 7
    %v2116 = vsub.s32 %v2029, %v2115
    %v2117 = vrot.slane %v1687, %v2116
    %v2118 = vlaneseq
    %v2119 = vshrl.u32 %v2118, 7
    %v2120 = vsub.s32 %v2029, %v2119
    %v2121 = vrot.slane %v1689, %v2120
    %v2122 = vlaneseq
    %v2123 = vshrl.u32 %v2122, 7
    %v2124 = vsub.s32 %v2029, %v2123
    %v2125 = vrot.slane %v1691, %v2124
    %v2126 = vlaneseq
    %v2127 = vshrl.u32 %v2126, 7
    %v2128 = vsub.s32 %v2029, %v2127
    %v2129 = vrot.slane %v1693, %v2128
    %v2130 = vlaneseq
    %v2131 = vshrl.u32 %v2130, 7
    %v2132 = vsub.s32 %v2029, %v2131
    %v2133 = vrot.slane %v1695, %v2132
    %v2134 = vlaneseq
    %v2135 = vshrl.u32 %v2134, 7
    %v2136 = vsub.s32 %v2029, %v2135
    %v2137 = vrot.slane %v1697, %v2136
    %v2138 = vlaneseq
    %v2139 = vshrl.u32 %v2138, 7
    %v2140 = vsub.s32 %v2029, %v2139
    %v2141 = vrot.slane %v1699, %v2140
    %v2142 = vlaneseq
    %v2143 = vshrl.u32 %v2142, 7
    %v2144 = vsub.s32 %v2029, %v2143
    %v2145 = vrot.slane %v1701, %v2144
    %v2146 = vlaneseq
    %v2147 = vshrl.u32 %v2146, 7
    %v2148 = vsub.s32 %v2029, %v2147
    %v2149 = vrot.slane %v1703, %v2148
    %v2150 = vlaneseq
    %v2151 = vshrl.u32 %v2150, 7
    %v2152 = vsub.s32 %v2029, %v2151
    %v2153 = vrot.slane %v1705, %v2152
    %v2154 = vlaneseq
    %v2155 = vshrl.u32 %v2154, 7
    %v2156 = vsub.s32 %v2029, %v2155
    %v2157 = vrot.slane %v1707, %v2156
    %v2158 = vlaneseq
    %v2159 = vshrl.u32 %v2158, 7
    %v2160 = vsub.s32 %v2029, %v2159
    %v2161 = vrot.slane %v1709, %v2160
    %v2162 = vlaneseq
    %v2163 = vshrl.u32 %v2162, 7
    %v2164 = vsub.s32 %v2029, %v2163
    %v2165 = vrot.slane %v1711, %v2164
    %v2166 = vlaneseq
    %v2167 = vshrl.u32 %v2166, 7
    %v2168 = vsub.s32 %v2029, %v2167
    %v2169 = vrot.slane %v1713, %v2168
    %v2170 = vlaneseq
    %v2171 = vshrl.u32 %v2170, 7
    %v2172 = vsub.s32 %v2029, %v2171
    %v2173 = vrot.slane %v1715, %v2172
    %v2174 = vlaneseq
    %v2175 = vshrl.u32 %v2174, 7
    %v2176 = vsub.s32 %v2029, %v2175
    %v2177 = vrot.slane %v1717, %v2176
    %v2178 = vlaneseq
    %v2179 = vshrl.u32 %v2178, 7
    %v2180 = vsub.s32 %v2029, %v2179
    %v2181 = vrot.slane %v1719, %v2180
    %v2182 = vlaneseq
    %v2183 = vshrl.u32 %v2182, 7
    %v2184 = vsub.s32 %v2029, %v2183
    %v2185 = vrot.slane %v1721, %v2184
    %v2186 = vlaneseq
    %v2187 = vshrl.u32 %v2186, 7
    %v2188 = vsub.s32 %v2029, %v2187
    %v2189 = vrot.slane %v1723, %v2188
    %v2190 = vlaneseq
    %v2191 = vshrl.u32 %v2190, 7
    %v2192 = vsub.s32 %v2029, %v2191
    %v2193 = vrot.slane %v1725, %v2192
    %v2194 = vlaneseq
    %v2195 = vshrl.u32 %v2194, 7
    %v2196 = vsub.s32 %v2029, %v2195
    %v2197 = vrot.slane %v1727, %v2196
    %v2198 = vlaneseq
    %v2199 = vshrl.u32 %v2198, 7
    %v2200 = vsub.s32 %v2029, %v2199
    %v2201 = vrot.slane %v1729, %v2200
    %v2202 = vlaneseq
    %v2203 = vshrl.u32 %v2202, 7
    %v2204 = vsub.s32 %v2029, %v2203
    %v2205 = vrot.slane %v1731, %v2204
    %v2206 = vlaneseq
    %v2207 = vshrl.u32 %v2206, 7
    %v2208 = vsub.s32 %v2029, %v2207
    %v2209 = vrot.slane %v1733, %v2208
    %v2210 = vlaneseq
    %v2211 = vshrl.u32 %v2210, 7
    %v2212 = vsub.s32 %v2029, %v2211
    %v2213 = vrot.slane %v1735, %v2212
    %v2214 = vlaneseq
    %v2215 = vshrl.u32 %v2214, 7
    %v2216 = vsub.s32 %v2029, %v2215
    %v2217 = vrot.slane %v1737, %v2216
    %v2218 = vlaneseq
    %v2219 = vshrl.u32 %v2218, 7
    %v2220 = vsub.s32 %v2029, %v2219
    %v2221 = vrot.slane %v1739, %v2220
    %v2222 = vlaneseq
    %v2223 = vshrl.u32 %v2222, 7
    %v2224 = vsub.s32 %v2029, %v2223
    %v2225 = vrot.slane %v1741, %v2224
    %v2226 = vlaneseq
    %v2227 = vshrl.u32 %v2226, 7
    %v2228 = vsub.s32 %v2029, %v2227
    %v2229 = vrot.slane %v1743, %v2228
    %v2230 = vlaneseq
    %v2231 = vshrl.u32 %v2230, 7
    %v2232 = vsub.s32 %v2029, %v2231
    %v2233 = vrot.slane %v1745, %v2232
    %v2234 = vlaneseq
    %v2235 = vshrl.u32 %v2234, 7
    %v2236 = vsub.s32 %v2029, %v2235
    %v2237 = vrot.slane %v1747, %v2236
    %v2238 = vlaneseq
    %v2239 = vshrl.u32 %v2238, 7
    %v2240 = vsub.s32 %v2029, %v2239
    %v2241 = vrot.slane %v1749, %v2240
    %v2242 = vlaneseq
    %v2243 = vshrl.u32 %v2242, 7
    %v2244 = vsub.s32 %v2029, %v2243
    %v2245 = vrot.slane %v1751, %v2244
    %v2246 = vlaneseq
    %v2247 = vshrl.u32 %v2246, 7
    %v2248 = vsub.s32 %v2029, %v2247
    %v2249 = vrot.slane %v1753, %v2248
    %v2250 = vlaneseq
    %v2251 = vshrl.u32 %v2250, 7
    %v2252 = vsub.s32 %v2029, %v2251
    %v2253 = vrot.slane %v1755, %v2252
    %v2254 = vlaneseq
    %v2255 = vshrl.u32 %v2254, 7
    %v2256 = vsub.s32 %v2029, %v2255
    %v2257 = vrot.slane %v1757, %v2256
    %v2258 = vlaneseq
    %v2259 = vshrl.u32 %v2258, 7
    %v2260 = vsub.s32 %v2029, %v2259
    %v2261 = vrot.slane %v1759, %v2260
    %v2262 = vlaneseq
    %v2263 = vshrl.u32 %v2262, 7
    %v2264 = vsub.s32 %v2029, %v2263
    %v2265 = vrot.slane %v1761, %v2264
    %v2266 = vlaneseq
    %v2267 = vshrl.u32 %v2266, 7
    %v2268 = vsub.s32 %v2029, %v2267
    %v2269 = vrot.slane %v1763, %v2268
    %v2270 = vlaneseq
    %v2271 = vshrl.u32 %v2270, 7
    %v2272 = vsub.s32 %v2029, %v2271
    %v2273 = vrot.slane %v1765, %v2272
    %v2274 = vlaneseq
    %v2275 = vshrl.u32 %v2274, 7
    %v2276 = vsub.s32 %v2029, %v2275
    %v2277 = vrot.slane %v1767, %v2276
    %v2278 = vlaneseq
    %v2279 = vshrl.u32 %v2278, 7
    %v2280 = vsub.s32 %v2029, %v2279
    %v2281 = vrot.slane %v1769, %v2280
    %v2282 = vlaneseq
    %v2283 = vshrl.u32 %v2282, 7
    %v2284 = vsub.s32 %v2029, %v2283
    %v2285 = vrot.slane %v1771, %v2284
    %v2286 = vlaneseq
    %v2287 = vshrl.u32 %v2286, 7
    %v2288 = vsub.s32 %v2029, %v2287
    %v2289 = vrot.slane %v1773, %v2288
    %v2290 = vlaneseq
    %v2291 = vshrl.u32 %v2290, 7
    %v2292 = vsub.s32 %v2029, %v2291
    %v2293 = vrot.slane %v1775, %v2292
    %v2294 = vlaneseq
    %v2295 = vshrl.u32 %v2294, 7
    %v2296 = vsub.s32 %v2029, %v2295
    %v2297 = vrot.slane %v1777, %v2296
    %v2298 = vlaneseq
    %v2299 = vshrl.u32 %v2298, 7
    %v2300 = vsub.s32 %v2029, %v2299
    %v2301 = vrot.slane %v1779, %v2300
    %v2302 = vlaneseq
    %v2303 = vshrl.u32 %v2302, 7
    %v2304 = vsub.s32 %v2029, %v2303
    %v2305 = vrot.slane %v1781, %v2304
    %v2306 = vlaneseq
    %v2307 = vshrl.u32 %v2306, 7
    %v2308 = vsub.s32 %v2029, %v2307
    %v2309 = vrot.slane %v1783, %v2308
    %v2310 = vlaneseq
    %v2311 = vshrl.u32 %v2310, 7
    %v2312 = vsub.s32 %v2029, %v2311
    %v2313 = vrot.slane %v1785, %v2312
    %v2314 = vlaneseq
    %v2315 = vshrl.u32 %v2314, 7
    %v2316 = vsub.s32 %v2029, %v2315
    %v2317 = vrot.slane %v1787, %v2316
    %v2318 = vlaneseq
    %v2319 = vshrl.u32 %v2318, 7
    %v2320 = vsub.s32 %v2029, %v2319
    %v2321 = vrot.slane %v1789, %v2320
    %v2322 = vlaneseq
    %v2323 = vshrl.u32 %v2322, 7
    %v2324 = vsub.s32 %v2029, %v2323
    %v2325 = vrot.slane %v1791, %v2324
    %v2326 = vlaneseq
    %v2327 = vshrl.u32 %v2326, 7
    %v2328 = vsub.s32 %v2029, %v2327
    %v2329 = vrot.slane %v1793, %v2328
    %v2330 = vlaneseq
    %v2331 = vshrl.u32 %v2330, 7
    %v2332 = vsub.s32 %v2029, %v2331
    %v2333 = vrot.slane %v1795, %v2332
    %v2334 = vlaneseq
    %v2335 = vshrl.u32 %v2334, 7
    %v2336 = vsub.s32 %v2029, %v2335
    %v2337 = vrot.slane %v1797, %v2336
    %v2338 = vlaneseq
    %v2339 = vshrl.u32 %v2338, 7
    %v2340 = vsub.s32 %v2029, %v2339
    %v2341 = vrot.slane %v1799, %v2340
    %v2342 = vlaneseq
    %v2343 = vshrl.u32 %v2342, 7
    %v2344 = vsub.s32 %v2029, %v2343
    %v2345 = vrot.slane %v1801, %v2344
    %v2346 = vlaneseq
    %v2347 = vshrl.u32 %v2346, 7
    %v2348 = vsub.s32 %v2029, %v2347
    %v2349 = vrot.slane %v1803, %v2348
    %v2350 = vlaneseq
    %v2351 = vshrl.u32 %v2350, 7
    %v2352 = vsub.s32 %v2029, %v2351
    %v2353 = vrot.slane %v1805, %v2352
    %v2354 = vlaneseq
    %v2355 = vshrl.u32 %v2354, 7
    %v2356 = vsub.s32 %v2029, %v2355
    %v2357 = vrot.slane %v1807, %v2356
    %v2358 = vlaneseq
    %v2359 = vshrl.u32 %v2358, 7
    %v2360 = vsub.s32 %v2029, %v2359
    %v2361 = vrot.slane %v1809, %v2360
    %v2362 = vlaneseq
    %v2363 = vshrl.u32 %v2362, 7
    %v2364 = vsub.s32 %v2029, %v2363
    %v2365 = vrot.slane %v1811, %v2364
    %v2366 = vlaneseq
    %v2367 = vshrl.u32 %v2366, 7
    %v2368 = vsub.s32 %v2029, %v2367
    %v2369 = vrot.slane %v1813, %v2368
    %v2370 = vlaneseq
    %v2371 = vshrl.u32 %v2370, 7
    %v2372 = vsub.s32 %v2029, %v2371
    %v2373 = vrot.slane %v1815, %v2372
    %v2374 = vlaneseq
    %v2375 = vshrl.u32 %v2374, 7
    %v2376 = vsub.s32 %v2029, %v2375
    %v2377 = vrot.slane %v1817, %v2376
    %v2378 = vlaneseq
    %v2379 = vshrl.u32 %v2378, 7
    %v2380 = vsub.s32 %v2029, %v2379
    %v2381 = vrot.slane %v1819, %v2380
    %v2382 = vlaneseq
    %v2383 = vshrl.u32 %v2382, 7
    %v2384 = vsub.s32 %v2029, %v2383
    %v2385 = vrot.slane %v1821, %v2384
    %v2386 = vlaneseq
    %v2387 = vshrl.u32 %v2386, 7
    %v2388 = vsub.s32 %v2029, %v2387
    %v2389 = vrot.slane %v1823, %v2388
    %v2390 = vlaneseq
    %v2391 = vshrl.u32 %v2390, 7
    %v2392 = vsub.s32 %v2029, %v2391
    %v2393 = vrot.slane %v1825, %v2392
    %v2394 = vlaneseq
    %v2395 = vshrl.u32 %v2394, 7
    %v2396 = vsub.s32 %v2029, %v2395
    %v2397 = vrot.slane %v1827, %v2396
    %v2398 = vlaneseq
    %v2399 = vshrl.u32 %v2398, 7
    %v2400 = vsub.s32 %v2029, %v2399
    %v2401 = vrot.slane %v1829, %v2400
    %v2402 = vlaneseq
    %v2403 = vshrl.u32 %v2402, 7
    %v2404 = vsub.s32 %v2029, %v2403
    %v2405 = vrot.slane %v1831, %v2404
    %v2406 = vlaneseq
    %v2407 = vshrl.u32 %v2406, 7
    %v2408 = vsub.s32 %v2029, %v2407
    %v2409 = vrot.slane %v1833, %v2408
    %v2410 = vlaneseq
    %v2411 = vshrl.u32 %v2410, 7
    %v2412 = vsub.s32 %v2029, %v2411
    %v2413 = vrot.slane %v1835, %v2412
    %v2414 = vlaneseq
    %v2415 = vshrl.u32 %v2414, 7
    %v2416 = vsub.s32 %v2029, %v2415
    %v2417 = vrot.slane %v1837, %v2416
    %v2418 = vlaneseq
    %v2419 = vshrl.u32 %v2418, 7
    %v2420 = vsub.s32 %v2029, %v2419
    %v2421 = vrot.slane %v1839, %v2420
    %v2422 = vlaneseq
    %v2423 = vshrl.u32 %v2422, 7
    %v2424 = vsub.s32 %v2029, %v2423
    %v2425 = vrot.slane %v1841, %v2424
    %v2426 = vlaneseq
    %v2427 = vshrl.u32 %v2426, 7
    %v2428 = vsub.s32 %v2029, %v2427
    %v2429 = vrot.slane %v1843, %v2428
    %v2430 = vlaneseq
    %v2431 = vshrl.u32 %v2430, 7
    %v2432 = vsub.s32 %v2029, %v2431
    %v2433 = vrot.slane %v1845, %v2432
    %v2434 = vlaneseq
    %v2435 = vshrl.u32 %v2434, 7
    %v2436 = vsub.s32 %v2029, %v2435
    %v2437 = vrot.slane %v1847, %v2436
    %v2438 = vlaneseq
    %v2439 = vshrl.u32 %v2438, 7
    %v2440 = vsub.s32 %v2029, %v2439
    %v2441 = vrot.slane %v1849, %v2440
    %v2442 = vlaneseq
    %v2443 = vshrl.u32 %v2442, 7
    %v2444 = vsub.s32 %v2029, %v2443
    %v2445 = vrot.slane %v1851, %v2444
    %v2446 = vlaneseq
    %v2447 = vshrl.u32 %v2446, 7
    %v2448 = vsub.s32 %v2029, %v2447
    %v2449 = vrot.slane %v1853, %v2448
    %v2450 = vlaneseq
    %v2451 = vshrl.u32 %v2450, 7
    %v2452 = vsub.s32 %v2029, %v2451
    %v2453 = vrot.slane %v1855, %v2452
    %v2454 = vlaneseq
    %v2455 = vshrl.u32 %v2454, 7
    %v2456 = vsub.s32 %v2029, %v2455
    %v2457 = vrot.slane %v1857, %v2456
    %v2458 = vlaneseq
    %v2459 = vshrl.u32 %v2458, 7
    %v2460 = vsub.s32 %v2029, %v2459
    %v2461 = vrot.slane %v1859, %v2460
    %v2462 = vlaneseq
    %v2463 = vshrl.u32 %v2462, 7
    %v2464 = vsub.s32 %v2029, %v2463
    %v2465 = vrot.slane %v1861, %v2464
    %v2466 = vlaneseq
    %v2467 = vshrl.u32 %v2466, 7
    %v2468 = vsub.s32 %v2029, %v2467
    %v2469 = vrot.slane %v1863, %v2468
    %v2470 = vlaneseq
    %v2471 = vshrl.u32 %v2470, 7
    %v2472 = vsub.s32 %v2029, %v2471
    %v2473 = vrot.slane %v1865, %v2472
    %v2474 = vlaneseq
    %v2475 = vshrl.u32 %v2474, 7
    %v2476 = vsub.s32 %v2029, %v2475
    %v2477 = vrot.slane %v1867, %v2476
    %v2478 = vlaneseq
    %v2479 = vshrl.u32 %v2478, 7
    %v2480 = vsub.s32 %v2029, %v2479
    %v2481 = vrot.slane %v1869, %v2480
    %v2482 = vlaneseq
    %v2483 = vshrl.u32 %v2482, 7
    %v2484 = vsub.s32 %v2029, %v2483
    %v2485 = vrot.slane %v1871, %v2484
    %v2486 = vlaneseq
    %v2487 = vshrl.u32 %v2486, 7
    %v2488 = vsub.s32 %v2029, %v2487
    %v2489 = vrot.slane %v1873, %v2488
    %v2490 = vlaneseq
    %v2491 = vshrl.u32 %v2490, 7
    %v2492 = vsub.s32 %v2029, %v2491
    %v2493 = vrot.slane %v1875, %v2492
    %v2494 = vlaneseq
    %v2495 = vshrl.u32 %v2494, 7
    %v2496 = vsub.s32 %v2029, %v2495
    %v2497 = vrot.slane %v1877, %v2496
    %v2498 = vlaneseq
    %v2499 = vshrl.u32 %v2498, 7
    %v2500 = vsub.s32 %v2029, %v2499
    %v2501 = vrot.slane %v1879, %v2500
    %v2502 = vlaneseq
    %v2503 = vshrl.u32 %v2502, 7
    %v2504 = vsub.s32 %v2029, %v2503
    %v2505 = vrot.slane %v1881, %v2504
    %v2506 = vlaneseq
    %v2507 = vshrl.u32 %v2506, 7
    %v2508 = vsub.s32 %v2029, %v2507
    %v2509 = vrot.slane %v1883, %v2508
    %v2510 = vlaneseq
    %v2511 = vshrl.u32 %v2510, 7
    %v2512 = vsub.s32 %v2029, %v2511
    %v2513 = vrot.slane %v1885, %v2512
    %v2514 = vlaneseq
    %v2515 = vshrl.u32 %v2514, 7
    %v2516 = vsub.s32 %v2029, %v2515
    %v2517 = vrot.slane %v1887, %v2516
    %v2518 = vlaneseq
    %v2519 = vshrl.u32 %v2518, 7
    %v2520 = vsub.s32 %v2029, %v2519
    %v2521 = vrot.slane %v1889, %v2520
    %v2522 = vlaneseq
    %v2523 = vshrl.u32 %v2522, 7
    %v2524 = vsub.s32 %v2029, %v2523
    %v2525 = vrot.slane %v1891, %v2524
    %v2526 = vlaneseq
    %v2527 = vshrl.u32 %v2526, 7
    %v2528 = vsub.s32 %v2029, %v2527
    %v2529 = vrot.slane %v1893, %v2528
    %v2530 = vlaneseq
    %v2531 = vshrl.u32 %v2530, 7
    %v2532 = vsub.s32 %v2029, %v2531
    %v2533 = vrot.slane %v1895, %v2532
    %v2534 = vlaneseq
    %v2535 = vshrl.u32 %v2534, 7
    %v2536 = vsub.s32 %v2029, %v2535
    %v2537 = vrot.slane %v1897, %v2536
    %v2538 = vlaneseq
    %v2539 = vshrl.u32 %v2538, 7
    %v2540 = vsub.s32 %v2029, %v2539
    %v2541 = vrot.slane %v1899, %v2540
    %vm2542 = vcmask 1041409
    %v2543 = vsel %vm2542, %v2037, %v2033
    %vm2544 = vcmask 1042434
    %v2545 = vsel %vm2544, %v2041, %v2543
    %vm2546 = vcmask 1043459
    %v2547 = vsel %vm2546, %v2045, %v2545
    %vm2548 = vcmask 1044484
    %v2549 = vsel %vm2548, %v2049, %v2547
    %vm2550 = vcmask 1045509
    %v2551 = vsel %vm2550, %v2053, %v2549
    %vm2552 = vcmask 1046534
    %v2553 = vsel %vm2552, %v2057, %v2551
    %vm2554 = vcmask 1047559
    %v2555 = vsel %vm2554, %v2061, %v2553
    %v2556 = vsel %vm2542, %v2069, %v2065
    %v2557 = vsel %vm2544, %v2073, %v2556
    %v2558 = vsel %vm2546, %v2077, %v2557
    %v2559 = vsel %vm2548, %v2081, %v2558
    %v2560 = vsel %vm2550, %v2085, %v2559
    %v2561 = vsel %vm2552, %v2089, %v2560
    %v2562 = vsel %vm2554, %v2093, %v2561
    %v2563 = vsel %vm2542, %v2101, %v2097
    %v2564 = vsel %vm2544, %v2105, %v2563
    %v2565 = vsel %vm2546, %v2109, %v2564
    %v2566 = vsel %vm2548, %v2113, %v2565
    %v2567 = vsel %vm2550, %v2117, %v2566
    %v2568 = vsel %vm2552, %v2121, %v2567
    %v2569 = vsel %vm2554, %v2125, %v2568
    %v2570 = vsel %vm2542, %v2133, %v2129
    %v2571 = vsel %vm2544, %v2137, %v2570
    %v2572 = vsel %vm2546, %v2141, %v2571
    %v2573 = vsel %vm2548, %v2145, %v2572
    %v2574 = vsel %vm2550, %v2149, %v2573
    %v2575 = vsel %vm2552, %v2153, %v2574
    %v2576 = vsel %vm2554, %v2157, %v2575
    %v2577 = vsel %vm2542, %v2165, %v2161
    %v2578 = vsel %vm2544, %v2169, %v2577
    %v2579 = vsel %vm2546, %v2173, %v2578
    %v2580 = vsel %vm2548, %v2177, %v2579
    %v2581 = vsel %vm2550, %v2181, %v2580
    %v2582 = vsel %vm2552, %v2185, %v2581
    %v2583 = vsel %vm2554, %v2189, %v2582
    %v2584 = vsel %vm2542, %v2197, %v2193
    %v2585 = vsel %vm2544, %v2201, %v2584
    %v2586 = vsel %vm2546, %v2205, %v2585
    %v2587 = vsel %vm2548, %v2209, %v2586
    %v2588 = vsel %vm2550, %v2213, %v2587
    %v2589 = vsel %vm2552, %v2217, %v2588
    %v2590 = vsel %vm2554, %v2221, %v2589
    %v2591 = vsel %vm2542, %v2229, %v2225
    %v2592 = vsel %vm2544, %v2233, %v2591
    %v2593 = vsel %vm2546, %v2237, %v2592
    %v2594 = vsel %vm2548, %v2241, %v2593
    %v2595 = vsel %vm2550, %v2245, %v2594
    %v2596 = vsel %vm2552, %v2249, %v2595
    %v2597 = vsel %vm2554, %v2253, %v2596
    %v2598 = vsel %vm2542, %v2261, %v2257
    %v2599 = vsel %vm2544, %v2265, %v2598
    %v2600 = vsel %vm2546, %v2269, %v2599
    %v2601 = vsel %vm2548, %v2273, %v2600
    %v2602 = vsel %vm2550, %v2277, %v2601
    %v2603 = vsel %vm2552, %v2281, %v2602
    %v2604 = vsel %vm2554, %v2285, %v2603
    %v2605 = vsel %vm2542, %v2293, %v2289
    %v2606 = vsel %vm2544, %v2297, %v2605
    %v2607 = vsel %vm2546, %v2301, %v2606
    %v2608 = vsel %vm2548, %v2305, %v2607
    %v2609 = vsel %vm2550, %v2309, %v2608
    %v2610 = vsel %vm2552, %v2313, %v2609
    %v2611 = vsel %vm2554, %v2317, %v2610
    %v2612 = vsel %vm2542, %v2325, %v2321
    %v2613 = vsel %vm2544, %v2329, %v2612
    %v2614 = vsel %vm2546, %v2333, %v2613
    %v2615 = vsel %vm2548, %v2337, %v2614
    %v2616 = vsel %vm2550, %v2341, %v2615
    %v2617 = vsel %vm2552, %v2345, %v2616
    %v2618 = vsel %vm2554, %v2349, %v2617
    %v2619 = vsel %vm2542, %v2357, %v2353
    %v2620 = vsel %vm2544, %v2361, %v2619
    %v2621 = vsel %vm2546, %v2365, %v2620
    %v2622 = vsel %vm2548, %v2369, %v2621
    %v2623 = vsel %vm2550, %v2373, %v2622
    %v2624 = vsel %vm2552, %v2377, %v2623
    %v2625 = vsel %vm2554, %v2381, %v2624
    %v2626 = vsel %vm2542, %v2389, %v2385
    %v2627 = vsel %vm2544, %v2393, %v2626
    %v2628 = vsel %vm2546, %v2397, %v2627
    %v2629 = vsel %vm2548, %v2401, %v2628
    %v2630 = vsel %vm2550, %v2405, %v2629
    %v2631 = vsel %vm2552, %v2409, %v2630
    %v2632 = vsel %vm2554, %v2413, %v2631
    %v2633 = vsel %vm2542, %v2421, %v2417
    %v2634 = vsel %vm2544, %v2425, %v2633
    %v2635 = vsel %vm2546, %v2429, %v2634
    %v2636 = vsel %vm2548, %v2433, %v2635
    %v2637 = vsel %vm2550, %v2437, %v2636
    %v2638 = vsel %vm2552, %v2441, %v2637
    %v2639 = vsel %vm2554, %v2445, %v2638
    %v2640 = vsel %vm2542, %v2453, %v2449
    %v2641 = vsel %vm2544, %v2457, %v2640
    %v2642 = vsel %vm2546, %v2461, %v2641
    %v2643 = vsel %vm2548, %v2465, %v2642
    %v2644 = vsel %vm2550, %v2469, %v2643
    %v2645 = vsel %vm2552, %v2473, %v2644
    %v2646 = vsel %vm2554, %v2477, %v2645
    %v2647 = vsel %vm2542, %v2485, %v2481
    %v2648 = vsel %vm2544, %v2489, %v2647
    %v2649 = vsel %vm2546, %v2493, %v2648
    %v2650 = vsel %vm2548, %v2497, %v2649
    %v2651 = vsel %vm2550, %v2501, %v2650
    %v2652 = vsel %vm2552, %v2505, %v2651
    %v2653 = vsel %vm2554, %v2509, %v2652
    %v2654 = vsel %vm2542, %v2517, %v2513
    %v2655 = vsel %vm2544, %v2521, %v2654
    %v2656 = vsel %vm2546, %v2525, %v2655
    %v2657 = vsel %vm2548, %v2529, %v2656
    %v2658 = vsel %vm2550, %v2533, %v2657
    %v2659 = vsel %vm2552, %v2537, %v2658
    %v2660 = vsel %vm2554, %v2541, %v2659
    %2677 = vxpose.xlu0.b32.start [1/16] %v2555, 128
    %2678 = vxpose.xlu0.b32.cont [2/16] %v2562, 128
    %2679 = vxpose.xlu0.b32.cont [3/16] %v2569, 128
    %2680 = vxpose.xlu0.b32.cont [4/16] %v2576, 128
    %2681 = vxpose.xlu0.b32.cont [5/16] %v2583, 128
    %2682 = vxpose.xlu0.b32.cont [6/16] %v2590, 128
    %2683 = vxpose.xlu0.b32.cont [7/16] %v2597, 128
    %2684 = vxpose.xlu0.b32.cont [8/16] %v2604, 128
    %2685 = vxpose.xlu0.b32.cont [9/16] %v2611, 128
    %2686 = vxpose.xlu0.b32.cont [10/16] %v2618, 128
    %2687 = vxpose.xlu0.b32.cont [11/16] %v2625, 128
    %2688 = vxpose.xlu0.b32.cont [12/16] %v2632, 128
    %2689 = vxpose.xlu0.b32.cont [13/16] %v2639, 128
    %2690 = vxpose.xlu0.b32.cont [14/16] %v2646, 128
    %2691 = vxpose.xlu0.b32.cont [15/16] %v2653, 128
    %2692 = vxpose.xlu0.b32.end [16/16] %v2660, 128
    %v2693 = vpop.trf.xlu0
    %v2694 = vpop.trf.xlu0
    %v2695 = vpop.trf.xlu0
    %v2696 = vpop.trf.xlu0
    %v2697 = vpop.trf.xlu0
    %v2698 = vpop.trf.xlu0
    %v2699 = vpop.trf.xlu0
    %v2700 = vpop.trf.xlu0
    %v2701 = vpop.trf.xlu0
    %v2702 = vpop.trf.xlu0
    %v2703 = vpop.trf.xlu0
    %v2704 = vpop.trf.xlu0
    %v2705 = vpop.trf.xlu0
    %v2706 = vpop.trf.xlu0
    %v2707 = vpop.trf.xlu0
    %v2708 = vpop.trf.xlu0
    %s2709 = smul.u32 0, 128
    %v2710 = vstv %s2709
    %v2711 = vadd.s32 %v2710, %v2029
    %vm2712 = vcmp.lt.s32.totalorder %v2711, 8
    %v2713 = vsel %vm2712, %v2693, -inf
    %s2714 = sshra.s32 %s2709, 7
    %s2715 = sand.u32 %s2709, 127
    %s2716 = scalar_lea.vmem [#allocation11], %s2714
    %2717 = vst [vmem:[%s2716] sm:$0xff] %v2713
    // Predicated region
    $region42: #{tpu_custom_call.1} parent=1 // pred_check
      %p2718 = pneg %p74
    $region43: #{tpu_custom_call.1} parent=1 // pred_check_branch
      %2720 = sbr.rel (%p2718) target = $region45
    $region44: #{tpu_custom_call.1} parent=1 // pred_region
      %v2721 = vld [vmem:[#allocation11] sm:$0xff]
      %2722 = vmax.xlane.f32.xlu0 %v2721
      %v2723 = vpop.xlane.xlu0 %2722
      %v2724 = vsub.f32 %v2721, %v2723
      %v2725 = vmul.f32 %v2724, 1.442695
      %v2726 = vpow.pop %v2725
      %2727 = vadd.xlane.f32.xlu0 %v2726
      %v2728 = vpop.xlane.xlu0 %2727
      %v2729 = vrcp.pop %v2728
      %v2730 = vmul.f32 %v2726, %v2729
      %2731 = vst [vmem:[#allocation11] sm:$0xff] %v2730
    $region45: #{tpu_custom_call.1} parent=1 // pred_fallthru
      _
    // Predicated region
    $region46: #{tpu_custom_call.1} parent=1 // pred_check
      _
    $region47: #{tpu_custom_call.1} parent=1 // pred_check_branch
      %2733 = sbr.rel (0) target = $region49
    $region48: #{tpu_custom_call.1} parent=1 // pred_region
      %s2735 = ssub.s32 128, 128
      %2736 = vsyncadd [#allocation5], %s2735
      %s2738 = sshll.u32 [#allocation11], 4
      %s2739 = int_to_ptr.vmem [resolvable:$true] %s2738
      %2741 = dma.vmem_to_hbm [thread:$0]  %s2739, 128, %s5, [#allocation5]
    $region49: #{tpu_custom_call.1} parent=1 // pred_fallthru
      _
    // Predicated region
    $region50: #{tpu_custom_call.1} parent=1 // pred_check
      _
    $region51: #{tpu_custom_call.1} parent=1 // pred_check_branch
      %2743 = sbr.rel (0) target = $region53
    $region52: #{tpu_custom_call.1} parent=1 // pred_region
      %2744 = dma.done [#allocation5], 128
    $region53: #{tpu_custom_call.1} parent=1 // pred_fallthru
      _
    %2745 = vsyncpa [#allocation4], 1
    %2746 = vsyncpa [#allocation7], 1
    %2747 = vsyncpa [#allocation10], 1
    %2748 = vsyncpa [#allocation5], 1

</llo_original>
